<compile_context>
chip_gen: v5e
topology: v5e:2x2
jax: 0.10.0
libtpu: 0.0.40
codegen_flags: <defaults>
</compile_context>

<pallas_src>
import jax
import jax.numpy as jnp
from jax.experimental import pallas as pl
from jax.experimental.pallas import tpu as pltpu

LAYERS = 64
H, W = 6, 7
S = H * W              # 42
D = S * LAYERS         # 2688 = 21 * 128 (lane-dense input width)
NOUT = 7
SPAD = 128             # padded conv-output / linear-K width
OPAD = 128             # padded output lane width


def policy_head_kernel(scal_ref, x_ref, wc_ref, wl_ref, bl_ref, out_ref):
    # scal_ref : SMEM f32[8]           [0] = b_eff (conv bias with BN folded in)
    # x_ref    : VMEM f32[NB, D]       NCHW-flattened input, index = c*42 + s
    # wc_ref   : VMEM bf16[D, SPAD]    block-structured 1x1-conv (+BN) weight
    # wl_ref   : VMEM bf16[SPAD, OPAD] zero-padded linear weight
    # bl_ref   : VMEM f32[1, OPAD]     linear bias; padded lanes hold -1e30
    # out_ref  : VMEM bf16[NB, OPAD]   softmax probabilities (cols >= 7 are 0)

    # 1x1 conv (+ folded BatchNorm scale) as an MXU matmul: (NB,D) @ (D,SPAD).
    x = x_ref[...].astype(jnp.bfloat16)          # cast in-kernel (no wrapper pass)
    p = jnp.dot(x, wc_ref[...], preferred_element_type=jnp.float32)
    p = jnp.maximum(p + scal_ref[0], 0.0)        # bias + ReLU

    # Linear 42 -> 7, padded to 128x128, bf16 operands, f32 accumulate.
    logits = jnp.dot(p.astype(jnp.bfloat16), wl_ref[...],
                     preferred_element_type=jnp.float32) + bl_ref[...]

    # logsoftmax(dim=1).exp() == softmax; padded lanes carry -1e30 -> exp = 0.
    m = jnp.max(logits, axis=-1, keepdims=True)
    e = jnp.exp(logits - m)
    inv = pl.reciprocal(jnp.sum(e, axis=-1, keepdims=True), approx=True)
    out_ref[...] = (e * inv).astype(out_ref.dtype)


def fold_params(params):
    """One-time parameter folding (call at load time, not per forward)."""
    inv = params["bn_gamma"] * jax.lax.rsqrt(params["bn_var"] + params["bn_eps"])
    w_eff = params["conv_w"].astype(jnp.float32) * inv                    # (64,)
    b_eff = (params["conv_b"] - params["bn_mean"]) * inv + params["bn_beta"]

    # Block-structured conv weight for NCHW flattening: wbig[c*S + s, s] = w_eff[c]
    rows = jnp.arange(D)
    c_idx = rows // S
    s_idx = rows % S
    wbig = jnp.zeros((D, SPAD), jnp.float32)
    wbig = wbig.at[rows, s_idx].set(w_eff[c_idx])
    wbig = wbig.astype(jnp.bfloat16)

    # Linear weight (7,42) -> transpose, zero-pad to (128,128), bf16; bias f32
    # (1,128) with -1e30 in the padded lanes so they vanish under softmax.
    wl = jnp.zeros((SPAD, OPAD), jnp.float32)
    wl = wl.at[:S, :NOUT].set(params["lin_w"].astype(jnp.float32).T)
    wl = wl.astype(jnp.bfloat16)
    bl = jnp.full((1, OPAD), -1e30, jnp.float32)
    bl = bl.at[0, :NOUT].set(params["lin_b"].astype(jnp.float32))

    scal = jnp.zeros((8,), jnp.float32).at[0].set(b_eff)
    return {"wbig": wbig, "wl": wl, "bl": bl, "scal": scal}


def _pick_tile_and_vmem():
    """Per-generation batch tile + VMEM limit (f32 x tile = nb * 10.5 KiB)."""
    try:
        vmem_cap = pltpu.get_tpu_info().vmem_capacity_bytes
    except Exception:
        vmem_cap = 64 * 1024 * 1024
    if vmem_cap >= 100 * 1024 * 1024:          # v5e / v6e: 128 MiB VMEM
        return 2048, 64 * 1024 * 1024          # ~44 MiB double-buffered
    return 1024, 32 * 1024 * 1024              # v7x: 64 MiB VMEM, ~23 MiB used


def policy_head(x_nchw, folded, nb=None):
    N = x_nchw.shape[0]
    nb_auto, vmem_limit = _pick_tile_and_vmem()
    if nb is None:
        nb = nb_auto

    # NCHW flatten is a free view: x2[n, c*42 + h*7 + w] == x[n, c, h, w].
    x2 = x_nchw.reshape(N, D).astype(jnp.float32)

    # Tile never larger than the (rounded) batch; multiple of 16 for tiling rules.
    nb = max(16, min(nb, pl.cdiv(N, 16) * 16))
    n_pad = pl.cdiv(N, nb) * nb
    if n_pad != N:                              # skip the pad pass when aligned
        x2 = jnp.pad(x2, ((0, n_pad - N), (0, 0)))

    grid = (n_pad // nb,)
    out = pl.pallas_call(
        policy_head_kernel,
        out_shape=jax.ShapeDtypeStruct((n_pad, OPAD), jnp.bfloat16),
        grid=grid,
        in_specs=[
            pl.BlockSpec(memory_space=pltpu.MemorySpace.SMEM),      # scalars
            pl.BlockSpec((nb, D), lambda i: (i, 0)),                # x tile
            pl.BlockSpec((D, SPAD), lambda i: (0, 0)),              # conv weight
            pl.BlockSpec((SPAD, OPAD), lambda i: (0, 0)),           # linear weight
            pl.BlockSpec((1, OPAD), lambda i: (0, 0)),              # linear bias
        ],
        out_specs=pl.BlockSpec((nb, OPAD), lambda i: (i, 0)),
        compiler_params=pltpu.CompilerParams(
            dimension_semantics=("parallel",),        # shards batch axis on v7x
            vmem_limit_bytes=vmem_limit),
    )(folded["scal"], x2, folded["wbig"], folded["wl"], folded["bl"])

    return out[:N, :NOUT].astype(jnp.float32)


if __name__ == "__main__":
    key = jax.random.PRNGKey(0)
    k1, k2, k3, k4 = jax.random.split(key, 4)

    # Deterministic synthetic parameters (shapes from the module __init__).
    params = {
        "conv_w": jax.random.normal(k1, (LAYERS,), jnp.float32) * 0.1,  # Conv2d(64,1,1)
        "conv_b": jnp.float32(0.05),
        "bn_gamma": jnp.float32(1.2),
        "bn_beta": jnp.float32(-0.1),
        "bn_mean": jnp.float32(0.2),
        "bn_var": jnp.float32(1.5),
        "bn_eps": jnp.float32(1e-5),
        "lin_w": jax.random.normal(k2, (NOUT, S), jnp.float32) * 0.1,   # Linear(42, 7)
        "lin_b": jax.random.normal(k3, (NOUT,), jnp.float32) * 0.1,
    }
    folded = jax.tree_util.tree_map(jax.block_until_ready, fold_params(params))

    N = 10  # deliberately not a multiple of 16 -> exercises tail padding
    x = jax.random.normal(k4, (N, LAYERS, H, W), jnp.float32)           # NCHW

    out = jax.block_until_ready(policy_head(x, folded))

    # Pure-JAX f32 reference for correctness.
    def ref(x):
        p = jnp.einsum("nchw,c->nhw", x, params["conv_w"]) + params["conv_b"]
        p = (p - params["bn_mean"]) / jnp.sqrt(params["bn_var"] + params["bn_eps"]) \
            * params["bn_gamma"] + params["bn_beta"]
        p = jnp.maximum(p, 0.0).reshape(N, S)
        logits = p @ params["lin_w"].T + params["lin_b"]
        return jax.nn.softmax(logits, axis=-1)

    expected = ref(x)
    assert out.shape == (N, NOUT)
    # bf16 matmuls + bf16 output transfer -> looser tolerance vs f32 reference.
    assert jnp.allclose(out, expected, atol=1e-2, rtol=1e-2), \
        float(jnp.max(jnp.abs(out - expected)))
    print("KERNEL_OK")
</pallas_src>

<mosaic_0001>
module attributes {stable_mosaic.version = 11 : i64} {
  func.func @policy_head_kernel(%arg0: i32, %arg1: memref<8xf32, #tpu.memory_space<smem>>, %arg2: memref<16x2688xf32, #tpu.memory_space<vmem>>, %arg3: memref<2688x128xbf16, #tpu.memory_space<vmem>>, %arg4: memref<128x128xbf16, #tpu.memory_space<vmem>>, %arg5: memref<1x128xf32, #tpu.memory_space<vmem>>, %arg6: memref<16x128xbf16, #tpu.memory_space<vmem>>) attributes {dimension_semantics = [#tpu.dimension_semantics<parallel>], iteration_bounds = array<i64: 1>, scalar_prefetch = 0 : i64, scratch_operands = 0 : i64, tpu.core_type = #tpu.core_type<tc>, window_params = [{transform_indices = @transform_0, window_bounds = array<i64: 8>}, {transform_indices = @transform_1, window_bounds = array<i64: 16, 2688>}, {pipeline_mode = #tpu.pipeline_mode<synchronous>, transform_indices = @transform_2, window_bounds = array<i64: 2688, 128>}, {pipeline_mode = #tpu.pipeline_mode<synchronous>, transform_indices = @transform_3, window_bounds = array<i64: 128, 128>}, {pipeline_mode = #tpu.pipeline_mode<synchronous>, transform_indices = @transform_4, window_bounds = array<i64: 1, 128>}, {transform_indices = @transform_5, window_bounds = array<i64: 16, 128>}]} {
    %c0 = arith.constant 0 : index
    %c0_0 = arith.constant 0 : index
    %0 = vector.load %arg2[%c0, %c0_0] : memref<16x2688xf32, #tpu.memory_space<vmem>>, vector<16x2688xf32>
    %1 = arith.truncf %0 : vector<16x2688xf32> to vector<16x2688xbf16>
    %c0_1 = arith.constant 0 : index
    %c0_2 = arith.constant 0 : index
    %2 = vector.load %arg3[%c0_1, %c0_2] : memref<2688x128xbf16, #tpu.memory_space<vmem>>, vector<2688x128xbf16>
    %cst = arith.constant dense<0.000000e+00> : vector<16x128xf32>
    %3 = tpu.matmul %1, %2, %cst {dimension_numbers = #tpu.dot_dimension_numbers<[1], [0], [0], [1], [0, 0, 1, 1], [], []>} : vector<16x2688xbf16>, vector<2688x128xbf16>, vector<16x128xf32> -> vector<16x128xf32>
    %c0_3 = arith.constant 0 : index
    %4 = memref.load %arg1[%c0_3] : memref<8xf32, #tpu.memory_space<smem>>
    %5 = vector.broadcast %4 : f32 to vector<16x128xf32>
    %6 = arith.addf %3, %5 : vector<16x128xf32>
    %cst_4 = arith.constant 0.000000e+00 : f32
    %7 = vector.broadcast %cst_4 : f32 to vector<16x128xf32>
    %8 = arith.maximumf %6, %7 : vector<16x128xf32>
    %9 = arith.truncf %8 : vector<16x128xf32> to vector<16x128xbf16>
    %c0_5 = arith.constant 0 : index
    %c0_6 = arith.constant 0 : index
    %10 = vector.load %arg4[%c0_5, %c0_6] : memref<128x128xbf16, #tpu.memory_space<vmem>>, vector<128x128xbf16>
    %cst_7 = arith.constant dense<0.000000e+00> : vector<16x128xf32>
    %11 = tpu.matmul %9, %10, %cst_7 {dimension_numbers = #tpu.dot_dimension_numbers<[1], [0], [0], [1], [0, 0, 1, 1], [], []>} : vector<16x128xbf16>, vector<128x128xbf16>, vector<16x128xf32> -> vector<16x128xf32>
    %c0_8 = arith.constant 0 : index
    %c0_9 = arith.constant 0 : index
    %12 = vector.load %arg5[%c0_8, %c0_9] : memref<1x128xf32, #tpu.memory_space<vmem>>, vector<1x128xf32>
    %13 = vector.broadcast %12 : vector<1x128xf32> to vector<16x128xf32>
    %14 = arith.addf %11, %13 : vector<16x128xf32>
    %cst_10 = arith.constant dense<0xFF800000> : vector<16xf32>
    %15 = vector.multi_reduction <maximumf>, %14, %cst_10 [1] : vector<16x128xf32> to vector<16xf32>
    %16 = vector.shape_cast %15 : vector<16xf32> to vector<16x1xf32>
    %17 = vector.broadcast %16 : vector<16x1xf32> to vector<16x128xf32>
    %18 = arith.subf %14, %17 : vector<16x128xf32>
    %19 = math.exp %18 : vector<16x128xf32>
    %cst_11 = arith.constant dense<0.000000e+00> : vector<16xf32>
    %20 = vector.multi_reduction <add>, %19, %cst_11 [1] : vector<16x128xf32> to vector<16xf32>
    %21 = vector.shape_cast %20 : vector<16xf32> to vector<16x1xf32>
    %22 = tpu.reciprocal %21 {approx = true} : vector<16x1xf32> -> vector<16x1xf32>
    %23 = vector.broadcast %22 : vector<16x1xf32> to vector<16x128xf32>
    %24 = arith.mulf %19, %23 : vector<16x128xf32>
    %25 = arith.truncf %24 : vector<16x128xf32> to vector<16x128xbf16>
    %c0_12 = arith.constant 0 : index
    %c0_13 = arith.constant 0 : index
    %26 = vector.load %arg6[%c0_12, %c0_13] : memref<16x128xbf16, #tpu.memory_space<vmem>>, vector<16x128xbf16>
    tpu.vector_store %arg6[%c0_12, %c0_13], %25 {strides = array<i32>} : memref<16x128xbf16, #tpu.memory_space<vmem>>, vector<16x128xbf16>,
    return
  }
  func.func @transform_0(%arg0: i32) -> i32 {
    %c0_i32 = arith.constant 0 : i32
    %c0_i32_0 = arith.constant 0 : i32
    return %c0_i32 : i32
  }
  func.func @transform_1(%arg0: i32) -> (i32, i32) {
    %c0_i32 = arith.constant 0 : i32
    %c0_i32_0 = arith.constant 0 : i32
    return %arg0, %c0_i32 : i32, i32
  }
  func.func @transform_2(%arg0: i32) -> (i32, i32) {
    %c0_i32 = arith.constant 0 : i32
    %c0_i32_0 = arith.constant 0 : i32
    %c0_i32_1 = arith.constant 0 : i32
    return %c0_i32, %c0_i32_0 : i32, i32
  }
  func.func @transform_3(%arg0: i32) -> (i32, i32) {
    %c0_i32 = arith.constant 0 : i32
    %c0_i32_0 = arith.constant 0 : i32
    %c0_i32_1 = arith.constant 0 : i32
    return %c0_i32, %c0_i32_0 : i32, i32
  }
  func.func @transform_4(%arg0: i32) -> (i32, i32) {
    %c0_i32 = arith.constant 0 : i32
    %c0_i32_0 = arith.constant 0 : i32
    %c0_i32_1 = arith.constant 0 : i32
    return %c0_i32, %c0_i32_0 : i32, i32
  }
  func.func @transform_5(%arg0: i32) -> (i32, i32) {
    %c0_i32 = arith.constant 0 : i32
    %c0_i32_0 = arith.constant 0 : i32
    return %arg0, %c0_i32 : i32, i32
  }
}

</mosaic_0001>

<llo_original>
// kernel: tpu_custom_call.1
$region0: #{tpu_custom_call.1}
  #allocation0 [shape = 'u32[]', space=smem, size = 0x4, offset = 0x4, fixed_abs, tag = 'smem constant byte address 0x4 - core index']
  #allocation1 [shape = 'u32[72,128]{1,0:T(1,128)}', space=vmem, size = 0x9000, scoped, tag = 'internal scratch']
  %s0 = inlined_call_operand.hbm [shape: f32[8], index: 0, kind: input, shape index: {}]
  %s1 = inlined_call_operand.hbm [shape: f32[16,2688], index: 1, kind: input, shape index: {}]
  %s2 = inlined_call_operand.hbm [shape: bf16[2688,128], index: 2, kind: input, shape index: {}]
  %s3 = inlined_call_operand.hbm [shape: bf16[128,128], index: 3, kind: input, shape index: {}]
  %s4 = inlined_call_operand.vmem [shape: f32[1,128], index: 4, kind: input, shape index: {}]
  %s5 = inlined_call_operand.hbm [shape: bf16[16,128], index: 5, kind: output, shape index: {}]
  %s6 = sld [smem:[#allocation0]]
  $region46: #{tpu_custom_call.1} parent=0
    _
  %s8 = ssub.s32 1, %s6
  %s9 = scalar_select 0, %s8, %s6
  $region1: #{tpu_custom_call.1} parent=0
    #allocation2 [shape = 'u8[512]{0}', space=smem, size = 0x200, scoped, tag = 'input window, operand 0, single buffered']
    #allocation3 [shape = 's32[1]{0}', space=sflag, size = 0x4, scoped, tag = 'scoped memory for tpu_custom_call.1']
    #allocation4 [shape = 's32[1]{0}', space=sflag, size = 0x4, scoped, tag = 'scoped memory for tpu_custom_call.1']
    #allocation5 [shape = 's32[1]{0}', space=sflag, size = 0x4, scoped, tag = 'scoped memory for tpu_custom_call.1']
    #allocation6 [shape = 'u8[172032]{0}', space=vmem, size = 0x2a000, scoped, tag = 'input window, operand 1, single buffered']
    #allocation7 [shape = 'u8[688128]{0}', space=vmem, size = 0xa8000, scoped, tag = 'input window, operand 2, single buffered']
    #allocation8 [shape = 's32[1]{0}', space=sflag, size = 0x4, scoped, tag = 'scoped memory for tpu_custom_call.1']
    #allocation9 [shape = 'u8[32768]{0}', space=vmem, size = 0x8000, scoped, tag = 'input window, operand 3, single buffered']
    #allocation10 [shape = 'u8[4096]{0}', space=vmem, size = 0x1000, scoped, tag = 'output window, operand 0, single buffered']
    %10 = vsyncpa [#allocation5], 0
    %11 = vsyncpa [#allocation3], 0
    %12 = vsyncpa [#allocation8], 0
    %13 = vsyncpa [#allocation4], 0
    // Predicated region
    $region2: #{tpu_custom_call.1} parent=1 // pred_check
      _
    $region3: #{tpu_custom_call.1} parent=1 // pred_check_branch
      %15 = sbr.rel (0) target = $region5
    $region4: #{tpu_custom_call.1} parent=1 // pred_region
      %17 = vsyncadd [#allocation5], 0
      %s19 = sshll.u32 %s0, 4
      %s20 = int_to_ptr.hbm [resolvable:$true] %s19
      %22 = dma.hbm_to_smem %s20, 16, [#allocation2], [#allocation5]
    $region5: #{tpu_custom_call.1} parent=1 // pred_fallthru
      _
    // Predicated region
    $region6: #{tpu_custom_call.1} parent=1 // pred_check
      _
    $region7: #{tpu_custom_call.1} parent=1 // pred_check_branch
      %24 = sbr.rel (0) target = $region9
    $region8: #{tpu_custom_call.1} parent=1 // pred_region
      %26 = vsyncadd [#allocation3], 0
      %s27 = sshll.u32 %s1, 4
      %s28 = int_to_ptr.hbm [resolvable:$true] %s27
      %s29 = sshll.u32 [#allocation6], 4
      %s30 = int_to_ptr.vmem [resolvable:$true] %s29
      %35 = dma.hbm_to_vmem [thread:$0]  %s28, 5376, %s30, [#allocation3], 2688, 2688, 168
    $region9: #{tpu_custom_call.1} parent=1 // pred_fallthru
      _
    // Predicated region
    $region10: #{tpu_custom_call.1} parent=1 // pred_check
      _
    $region11: #{tpu_custom_call.1} parent=1 // pred_check_branch
      %37 = sbr.rel (0) target = $region13
    $region12: #{tpu_custom_call.1} parent=1 // pred_region
      %39 = vsyncadd [#allocation8], 0
      %s40 = sshll.u32 %s2, 4
      %s41 = int_to_ptr.hbm [resolvable:$true] %s40
      %s42 = sshll.u32 [#allocation7], 4
      %s43 = int_to_ptr.vmem [resolvable:$true] %s42
      %48 = dma.hbm_to_vmem [thread:$0]  %s41, 21504, %s43, [#allocation8], 64, 64, 4
    $region13: #{tpu_custom_call.1} parent=1 // pred_fallthru
      _
    // Predicated region
    $region14: #{tpu_custom_call.1} parent=1 // pred_check
      _
    $region15: #{tpu_custom_call.1} parent=1 // pred_check_branch
      %50 = sbr.rel (0) target = $region17
    $region16: #{tpu_custom_call.1} parent=1 // pred_region
      %52 = vsyncadd [#allocation8], 0
      %s53 = sshll.u32 %s3, 4
      %s54 = int_to_ptr.hbm [resolvable:$true] %s53
      %s55 = sshll.u32 [#allocation9], 4
      %s56 = int_to_ptr.vmem [resolvable:$true] %s55
      %61 = dma.hbm_to_vmem [thread:$0]  %s54, 1024, %s56, [#allocation8], 64, 64, 4
    $region17: #{tpu_custom_call.1} parent=1 // pred_fallthru
      _
    // Predicated region
    $region18: #{tpu_custom_call.1} parent=1 // pred_check
      _
    $region19: #{tpu_custom_call.1} parent=1 // pred_check_branch
      %63 = sbr.rel (0) target = $region21
    $region20: #{tpu_custom_call.1} parent=1 // pred_region
      _
    $region21: #{tpu_custom_call.1} parent=1 // pred_fallthru
      _
    // Predicated region
    $region22: #{tpu_custom_call.1} parent=1 // pred_check
      _
    $region23: #{tpu_custom_call.1} parent=1 // pred_check_branch
      %65 = sbr.rel (0) target = $region25
    $region24: #{tpu_custom_call.1} parent=1 // pred_region
      %67 = dma.done [#allocation5], 16
    $region25: #{tpu_custom_call.1} parent=1 // pred_fallthru
      _
    // Predicated region
    $region26: #{tpu_custom_call.1} parent=1 // pred_check
      _
    $region27: #{tpu_custom_call.1} parent=1 // pred_check_branch
      %69 = sbr.rel (0) target = $region29
    $region28: #{tpu_custom_call.1} parent=1 // pred_region
      %71 = dma.done [#allocation3], 5376
    $region29: #{tpu_custom_call.1} parent=1 // pred_fallthru
      _
    // Predicated region
    $region30: #{tpu_custom_call.1} parent=1 // pred_check
      _
    $region31: #{tpu_custom_call.1} parent=1 // pred_check_branch
      %73 = sbr.rel (0) target = $region33
    $region32: #{tpu_custom_call.1} parent=1 // pred_region
      %75 = dma.done [#allocation8], 21504
    $region33: #{tpu_custom_call.1} parent=1 // pred_fallthru
      _
    // Predicated region
    $region34: #{tpu_custom_call.1} parent=1 // pred_check
      _
    $region35: #{tpu_custom_call.1} parent=1 // pred_check_branch
      %77 = sbr.rel (0) target = $region37
    $region36: #{tpu_custom_call.1} parent=1 // pred_region
      %79 = dma.done [#allocation8], 1024
    $region37: #{tpu_custom_call.1} parent=1 // pred_fallthru
      _
    %80 = sfence
    %v81 = vld [vmem:[#allocation6] sm:$0xff]
    %v82 = vld [vmem:[#allocation6 + $0x8] sm:$0xff]
    %v83 = vld [vmem:[#allocation6 + $0x10] sm:$0xff]
    %v84 = vld [vmem:[#allocation6 + $0x18] sm:$0xff]
    %v85 = vld [vmem:[#allocation6 + $0x20] sm:$0xff]
    %v86 = vld [vmem:[#allocation6 + $0x28] sm:$0xff]
    %v87 = vld [vmem:[#allocation6 + $0x30] sm:$0xff]
    %v88 = vld [vmem:[#allocation6 + $0x38] sm:$0xff]
    %v89 = vld [vmem:[#allocation6 + $0x40] sm:$0xff]
    %v90 = vld [vmem:[#allocation6 + $0x48] sm:$0xff]
    %v91 = vld [vmem:[#allocation6 + $0x50] sm:$0xff]
    %v92 = vld [vmem:[#allocation6 + $0x58] sm:$0xff]
    %v93 = vld [vmem:[#allocation6 + $0x60] sm:$0xff]
    %v94 = vld [vmem:[#allocation6 + $0x68] sm:$0xff]
    %v95 = vld [vmem:[#allocation6 + $0x70] sm:$0xff]
    %v96 = vld [vmem:[#allocation6 + $0x78] sm:$0xff]
    %v97 = vld [vmem:[#allocation6 + $0x80] sm:$0xff]
    %v98 = vld [vmem:[#allocation6 + $0x88] sm:$0xff]
    %v99 = vld [vmem:[#allocation6 + $0x90] sm:$0xff]
    %v100 = vld [vmem:[#allocation6 + $0x98] sm:$0xff]
    %v101 = vld [vmem:[#allocation6 + $0xa0] sm:$0xff]
    %v102 = vld [vmem:[#allocation6 + $0xa8] sm:$0xff]
    %v103 = vld [vmem:[#allocation6 + $0xb0] sm:$0xff]
    %v104 = vld [vmem:[#allocation6 + $0xb8] sm:$0xff]
    %v105 = vld [vmem:[#allocation6 + $0xc0] sm:$0xff]
    %v106 = vld [vmem:[#allocation6 + $0xc8] sm:$0xff]
    %v107 = vld [vmem:[#allocation6 + $0xd0] sm:$0xff]
    %v108 = vld [vmem:[#allocation6 + $0xd8] sm:$0xff]
    %v109 = vld [vmem:[#allocation6 + $0xe0] sm:$0xff]
    %v110 = vld [vmem:[#allocation6 + $0xe8] sm:$0xff]
    %v111 = vld [vmem:[#allocation6 + $0xf0] sm:$0xff]
    %v112 = vld [vmem:[#allocation6 + $0xf8] sm:$0xff]
    %v113 = vld [vmem:[#allocation6 + $0x100] sm:$0xff]
    %v114 = vld [vmem:[#allocation6 + $0x108] sm:$0xff]
    %v115 = vld [vmem:[#allocation6 + $0x110] sm:$0xff]
    %v116 = vld [vmem:[#allocation6 + $0x118] sm:$0xff]
    %v117 = vld [vmem:[#allocation6 + $0x120] sm:$0xff]
    %v118 = vld [vmem:[#allocation6 + $0x128] sm:$0xff]
    %v119 = vld [vmem:[#allocation6 + $0x130] sm:$0xff]
    %v120 = vld [vmem:[#allocation6 + $0x138] sm:$0xff]
    %v121 = vld [vmem:[#allocation6 + $0x140] sm:$0xff]
    %v122 = vld [vmem:[#allocation6 + $0x148] sm:$0xff]
    %v123 = vpack.c.bf16 %v102, %v81
    %v124 = vpack.c.bf16 %v103, %v82
    %v125 = vpack.c.bf16 %v104, %v83
    %v126 = vpack.c.bf16 %v105, %v84
    %v127 = vpack.c.bf16 %v106, %v85
    %v128 = vpack.c.bf16 %v107, %v86
    %v129 = vpack.c.bf16 %v108, %v87
    %v130 = vpack.c.bf16 %v109, %v88
    %v131 = vpack.c.bf16 %v110, %v89
    %v132 = vpack.c.bf16 %v111, %v90
    %v133 = vpack.c.bf16 %v112, %v91
    %v134 = vpack.c.bf16 %v113, %v92
    %v135 = vpack.c.bf16 %v114, %v93
    %v136 = vpack.c.bf16 %v115, %v94
    %v137 = vpack.c.bf16 %v116, %v95
    %v138 = vpack.c.bf16 %v117, %v96
    %v139 = vpack.c.bf16 %v118, %v97
    %v140 = vpack.c.bf16 %v119, %v98
    %v141 = vpack.c.bf16 %v120, %v99
    %v142 = vpack.c.bf16 %v121, %v100
    %v143 = vpack.c.bf16 %v122, %v101
    %v144 = vld [vmem:[#allocation7] sm:$0xf]
    %v145 = vld [vmem:[#allocation7 + $0x4] sm:$0xf]
    %v146 = vld [vmem:[#allocation7 + $0x8] sm:$0xf]
    %v147 = vld [vmem:[#allocation7 + $0xc] sm:$0xf]
    %v148 = vld [vmem:[#allocation7 + $0x10] sm:$0xf]
    %v149 = vld [vmem:[#allocation7 + $0x14] sm:$0xf]
    %v150 = vld [vmem:[#allocation7 + $0x18] sm:$0xf]
    %v151 = vld [vmem:[#allocation7 + $0x1c] sm:$0xf]
    %v152 = vld [vmem:[#allocation7 + $0x20] sm:$0xf]
    %v153 = vld [vmem:[#allocation7 + $0x24] sm:$0xf]
    %v154 = vld [vmem:[#allocation7 + $0x28] sm:$0xf]
    %v155 = vld [vmem:[#allocation7 + $0x2c] sm:$0xf]
    %v156 = vld [vmem:[#allocation7 + $0x30] sm:$0xf]
    %v157 = vld [vmem:[#allocation7 + $0x34] sm:$0xf]
    %v158 = vld [vmem:[#allocation7 + $0x38] sm:$0xf]
    %v159 = vld [vmem:[#allocation7 + $0x3c] sm:$0xf]
    %v160 = vld [vmem:[#allocation7 + $0x40] sm:$0xf]
    %v161 = vld [vmem:[#allocation7 + $0x44] sm:$0xf]
    %v162 = vld [vmem:[#allocation7 + $0x48] sm:$0xf]
    %v163 = vld [vmem:[#allocation7 + $0x4c] sm:$0xf]
    %v164 = vld [vmem:[#allocation7 + $0x50] sm:$0xf]
    %v165 = vld [vmem:[#allocation7 + $0x54] sm:$0xf]
    %v166 = vld [vmem:[#allocation7 + $0x58] sm:$0xf]
    %v167 = vld [vmem:[#allocation7 + $0x5c] sm:$0xf]
    %v168 = vld [vmem:[#allocation7 + $0x60] sm:$0xf]
    %v169 = vld [vmem:[#allocation7 + $0x64] sm:$0xf]
    %v170 = vld [vmem:[#allocation7 + $0x68] sm:$0xf]
    %v171 = vld [vmem:[#allocation7 + $0x6c] sm:$0xf]
    %v172 = vld [vmem:[#allocation7 + $0x70] sm:$0xf]
    %v173 = vld [vmem:[#allocation7 + $0x74] sm:$0xf]
    %v174 = vld [vmem:[#allocation7 + $0x78] sm:$0xf]
    %v175 = vld [vmem:[#allocation7 + $0x7c] sm:$0xf]
    %v176 = vld [vmem:[#allocation7 + $0x80] sm:$0xf]
    %v177 = vld [vmem:[#allocation7 + $0x84] sm:$0xf]
    %v178 = vld [vmem:[#allocation7 + $0x88] sm:$0xf]
    %v179 = vld [vmem:[#allocation7 + $0x8c] sm:$0xf]
    %v180 = vld [vmem:[#allocation7 + $0x90] sm:$0xf]
    %v181 = vld [vmem:[#allocation7 + $0x94] sm:$0xf]
    %v182 = vld [vmem:[#allocation7 + $0x98] sm:$0xf]
    %v183 = vld [vmem:[#allocation7 + $0x9c] sm:$0xf]
    %v184 = vld [vmem:[#allocation7 + $0xa0] sm:$0xf]
    %v185 = vld [vmem:[#allocation7 + $0xa4] sm:$0xf]
    %v186 = vld [vmem:[#allocation7 + $0xa8] sm:$0xf]
    %v187 = vld [vmem:[#allocation7 + $0xac] sm:$0xf]
    %v188 = vld [vmem:[#allocation7 + $0xb0] sm:$0xf]
    %v189 = vld [vmem:[#allocation7 + $0xb4] sm:$0xf]
    %v190 = vld [vmem:[#allocation7 + $0xb8] sm:$0xf]
    %v191 = vld [vmem:[#allocation7 + $0xbc] sm:$0xf]
    %v192 = vld [vmem:[#allocation7 + $0xc0] sm:$0xf]
    %v193 = vld [vmem:[#allocation7 + $0xc4] sm:$0xf]
    %v194 = vld [vmem:[#allocation7 + $0xc8] sm:$0xf]
    %v195 = vld [vmem:[#allocation7 + $0xcc] sm:$0xf]
    %v196 = vld [vmem:[#allocation7 + $0xd0] sm:$0xf]
    %v197 = vld [vmem:[#allocation7 + $0xd4] sm:$0xf]
    %v198 = vld [vmem:[#allocation7 + $0xd8] sm:$0xf]
    %v199 = vld [vmem:[#allocation7 + $0xdc] sm:$0xf]
    %v200 = vld [vmem:[#allocation7 + $0xe0] sm:$0xf]
    %v201 = vld [vmem:[#allocation7 + $0xe4] sm:$0xf]
    %v202 = vld [vmem:[#allocation7 + $0xe8] sm:$0xf]
    %v203 = vld [vmem:[#allocation7 + $0xec] sm:$0xf]
    %v204 = vld [vmem:[#allocation7 + $0xf0] sm:$0xf]
    %v205 = vld [vmem:[#allocation7 + $0xf4] sm:$0xf]
    %v206 = vld [vmem:[#allocation7 + $0xf8] sm:$0xf]
    %v207 = vld [vmem:[#allocation7 + $0xfc] sm:$0xf]
    %v208 = vld [vmem:[#allocation7 + $0x100] sm:$0xf]
    %v209 = vld [vmem:[#allocation7 + $0x104] sm:$0xf]
    %v210 = vld [vmem:[#allocation7 + $0x108] sm:$0xf]
    %v211 = vld [vmem:[#allocation7 + $0x10c] sm:$0xf]
    %v212 = vld [vmem:[#allocation7 + $0x110] sm:$0xf]
    %v213 = vld [vmem:[#allocation7 + $0x114] sm:$0xf]
    %v214 = vld [vmem:[#allocation7 + $0x118] sm:$0xf]
    %v215 = vld [vmem:[#allocation7 + $0x11c] sm:$0xf]
    %v216 = vld [vmem:[#allocation7 + $0x120] sm:$0xf]
    %v217 = vld [vmem:[#allocation7 + $0x124] sm:$0xf]
    %v218 = vld [vmem:[#allocation7 + $0x128] sm:$0xf]
    %v219 = vld [vmem:[#allocation7 + $0x12c] sm:$0xf]
    %v220 = vld [vmem:[#allocation7 + $0x130] sm:$0xf]
    %v221 = vld [vmem:[#allocation7 + $0x134] sm:$0xf]
    %v222 = vld [vmem:[#allocation7 + $0x138] sm:$0xf]
    %v223 = vld [vmem:[#allocation7 + $0x13c] sm:$0xf]
    %v224 = vld [vmem:[#allocation7 + $0x140] sm:$0xf]
    %v225 = vld [vmem:[#allocation7 + $0x144] sm:$0xf]
    %v226 = vld [vmem:[#allocation7 + $0x148] sm:$0xf]
    %v227 = vld [vmem:[#allocation7 + $0x14c] sm:$0xf]
    %v228 = vld [vmem:[#allocation7 + $0x150] sm:$0xf]
    %v229 = vld [vmem:[#allocation7 + $0x154] sm:$0xf]
    %v230 = vld [vmem:[#allocation7 + $0x158] sm:$0xf]
    %v231 = vld [vmem:[#allocation7 + $0x15c] sm:$0xf]
    %v232 = vld [vmem:[#allocation7 + $0x160] sm:$0xf]
    %v233 = vld [vmem:[#allocation7 + $0x164] sm:$0xf]
    %v234 = vld [vmem:[#allocation7 + $0x168] sm:$0xf]
    %v235 = vld [vmem:[#allocation7 + $0x16c] sm:$0xf]
    %v236 = vld [vmem:[#allocation7 + $0x170] sm:$0xf]
    %v237 = vld [vmem:[#allocation7 + $0x174] sm:$0xf]
    %v238 = vld [vmem:[#allocation7 + $0x178] sm:$0xf]
    %v239 = vld [vmem:[#allocation7 + $0x17c] sm:$0xf]
    %v240 = vld [vmem:[#allocation7 + $0x180] sm:$0xf]
    %v241 = vld [vmem:[#allocation7 + $0x184] sm:$0xf]
    %v242 = vld [vmem:[#allocation7 + $0x188] sm:$0xf]
    %v243 = vld [vmem:[#allocation7 + $0x18c] sm:$0xf]
    %v244 = vld [vmem:[#allocation7 + $0x190] sm:$0xf]
    %v245 = vld [vmem:[#allocation7 + $0x194] sm:$0xf]
    %v246 = vld [vmem:[#allocation7 + $0x198] sm:$0xf]
    %v247 = vld [vmem:[#allocation7 + $0x19c] sm:$0xf]
    %v248 = vld [vmem:[#allocation7 + $0x1a0] sm:$0xf]
    %v249 = vld [vmem:[#allocation7 + $0x1a4] sm:$0xf]
    %v250 = vld [vmem:[#allocation7 + $0x1a8] sm:$0xf]
    %v251 = vld [vmem:[#allocation7 + $0x1ac] sm:$0xf]
    %v252 = vld [vmem:[#allocation7 + $0x1b0] sm:$0xf]
    %v253 = vld [vmem:[#allocation7 + $0x1b4] sm:$0xf]
    %v254 = vld [vmem:[#allocation7 + $0x1b8] sm:$0xf]
    %v255 = vld [vmem:[#allocation7 + $0x1bc] sm:$0xf]
    %v256 = vld [vmem:[#allocation7 + $0x1c0] sm:$0xf]
    %v257 = vld [vmem:[#allocation7 + $0x1c4] sm:$0xf]
    %v258 = vld [vmem:[#allocation7 + $0x1c8] sm:$0xf]
    %v259 = vld [vmem:[#allocation7 + $0x1cc] sm:$0xf]
    %v260 = vld [vmem:[#allocation7 + $0x1d0] sm:$0xf]
    %v261 = vld [vmem:[#allocation7 + $0x1d4] sm:$0xf]
    %v262 = vld [vmem:[#allocation7 + $0x1d8] sm:$0xf]
    %v263 = vld [vmem:[#allocation7 + $0x1dc] sm:$0xf]
    %v264 = vld [vmem:[#allocation7 + $0x1e0] sm:$0xf]
    %v265 = vld [vmem:[#allocation7 + $0x1e4] sm:$0xf]
    %v266 = vld [vmem:[#allocation7 + $0x1e8] sm:$0xf]
    %v267 = vld [vmem:[#allocation7 + $0x1ec] sm:$0xf]
    %v268 = vld [vmem:[#allocation7 + $0x1f0] sm:$0xf]
    %v269 = vld [vmem:[#allocation7 + $0x1f4] sm:$0xf]
    %v270 = vld [vmem:[#allocation7 + $0x1f8] sm:$0xf]
    %v271 = vld [vmem:[#allocation7 + $0x1fc] sm:$0xf]
    %v272 = vld [vmem:[#allocation7 + $0x200] sm:$0xf]
    %v273 = vld [vmem:[#allocation7 + $0x204] sm:$0xf]
    %v274 = vld [vmem:[#allocation7 + $0x208] sm:$0xf]
    %v275 = vld [vmem:[#allocation7 + $0x20c] sm:$0xf]
    %v276 = vld [vmem:[#allocation7 + $0x210] sm:$0xf]
    %v277 = vld [vmem:[#allocation7 + $0x214] sm:$0xf]
    %v278 = vld [vmem:[#allocation7 + $0x218] sm:$0xf]
    %v279 = vld [vmem:[#allocation7 + $0x21c] sm:$0xf]
    %v280 = vld [vmem:[#allocation7 + $0x220] sm:$0xf]
    %v281 = vld [vmem:[#allocation7 + $0x224] sm:$0xf]
    %v282 = vld [vmem:[#allocation7 + $0x228] sm:$0xf]
    %v283 = vld [vmem:[#allocation7 + $0x22c] sm:$0xf]
    %v284 = vld [vmem:[#allocation7 + $0x230] sm:$0xf]
    %v285 = vld [vmem:[#allocation7 + $0x234] sm:$0xf]
    %v286 = vld [vmem:[#allocation7 + $0x238] sm:$0xf]
    %v287 = vld [vmem:[#allocation7 + $0x23c] sm:$0xf]
    %v288 = vld [vmem:[#allocation7 + $0x240] sm:$0xf]
    %v289 = vld [vmem:[#allocation7 + $0x244] sm:$0xf]
    %v290 = vld [vmem:[#allocation7 + $0x248] sm:$0xf]
    %v291 = vld [vmem:[#allocation7 + $0x24c] sm:$0xf]
    %v292 = vld [vmem:[#allocation7 + $0x250] sm:$0xf]
    %v293 = vld [vmem:[#allocation7 + $0x254] sm:$0xf]
    %v294 = vld [vmem:[#allocation7 + $0x258] sm:$0xf]
    %v295 = vld [vmem:[#allocation7 + $0x25c] sm:$0xf]
    %v296 = vld [vmem:[#allocation7 + $0x260] sm:$0xf]
    %v297 = vld [vmem:[#allocation7 + $0x264] sm:$0xf]
    %v298 = vld [vmem:[#allocation7 + $0x268] sm:$0xf]
    %v299 = vld [vmem:[#allocation7 + $0x26c] sm:$0xf]
    %v300 = vld [vmem:[#allocation7 + $0x270] sm:$0xf]
    %v301 = vld [vmem:[#allocation7 + $0x274] sm:$0xf]
    %v302 = vld [vmem:[#allocation7 + $0x278] sm:$0xf]
    %v303 = vld [vmem:[#allocation7 + $0x27c] sm:$0xf]
    %v304 = vld [vmem:[#allocation7 + $0x280] sm:$0xf]
    %v305 = vld [vmem:[#allocation7 + $0x284] sm:$0xf]
    %v306 = vld [vmem:[#allocation7 + $0x288] sm:$0xf]
    %v307 = vld [vmem:[#allocation7 + $0x28c] sm:$0xf]
    %v308 = vld [vmem:[#allocation7 + $0x290] sm:$0xf]
    %v309 = vld [vmem:[#allocation7 + $0x294] sm:$0xf]
    %v310 = vld [vmem:[#allocation7 + $0x298] sm:$0xf]
    %v311 = vld [vmem:[#allocation7 + $0x29c] sm:$0xf]
    %v312 = vld [vmem:[#allocation7 + $0x2a0] sm:$0xf]
    %v313 = vld [vmem:[#allocation7 + $0x2a4] sm:$0xf]
    %v314 = vld [vmem:[#allocation7 + $0x2a8] sm:$0xf]
    %v315 = vld [vmem:[#allocation7 + $0x2ac] sm:$0xf]
    %v316 = vld [vmem:[#allocation7 + $0x2b0] sm:$0xf]
    %v317 = vld [vmem:[#allocation7 + $0x2b4] sm:$0xf]
    %v318 = vld [vmem:[#allocation7 + $0x2b8] sm:$0xf]
    %v319 = vld [vmem:[#allocation7 + $0x2bc] sm:$0xf]
    %v320 = vld [vmem:[#allocation7 + $0x2c0] sm:$0xf]
    %v321 = vld [vmem:[#allocation7 + $0x2c4] sm:$0xf]
    %v322 = vld [vmem:[#allocation7 + $0x2c8] sm:$0xf]
    %v323 = vld [vmem:[#allocation7 + $0x2cc] sm:$0xf]
    %v324 = vld [vmem:[#allocation7 + $0x2d0] sm:$0xf]
    %v325 = vld [vmem:[#allocation7 + $0x2d4] sm:$0xf]
    %v326 = vld [vmem:[#allocation7 + $0x2d8] sm:$0xf]
    %v327 = vld [vmem:[#allocation7 + $0x2dc] sm:$0xf]
    %v328 = vld [vmem:[#allocation7 + $0x2e0] sm:$0xf]
    %v329 = vld [vmem:[#allocation7 + $0x2e4] sm:$0xf]
    %v330 = vld [vmem:[#allocation7 + $0x2e8] sm:$0xf]
    %v331 = vld [vmem:[#allocation7 + $0x2ec] sm:$0xf]
    %v332 = vld [vmem:[#allocation7 + $0x2f0] sm:$0xf]
    %v333 = vld [vmem:[#allocation7 + $0x2f4] sm:$0xf]
    %v334 = vld [vmem:[#allocation7 + $0x2f8] sm:$0xf]
    %v335 = vld [vmem:[#allocation7 + $0x2fc] sm:$0xf]
    %v336 = vld [vmem:[#allocation7 + $0x300] sm:$0xf]
    %v337 = vld [vmem:[#allocation7 + $0x304] sm:$0xf]
    %v338 = vld [vmem:[#allocation7 + $0x308] sm:$0xf]
    %v339 = vld [vmem:[#allocation7 + $0x30c] sm:$0xf]
    %v340 = vld [vmem:[#allocation7 + $0x310] sm:$0xf]
    %v341 = vld [vmem:[#allocation7 + $0x314] sm:$0xf]
    %v342 = vld [vmem:[#allocation7 + $0x318] sm:$0xf]
    %v343 = vld [vmem:[#allocation7 + $0x31c] sm:$0xf]
    %v344 = vld [vmem:[#allocation7 + $0x320] sm:$0xf]
    %v345 = vld [vmem:[#allocation7 + $0x324] sm:$0xf]
    %v346 = vld [vmem:[#allocation7 + $0x328] sm:$0xf]
    %v347 = vld [vmem:[#allocation7 + $0x32c] sm:$0xf]
    %v348 = vld [vmem:[#allocation7 + $0x330] sm:$0xf]
    %v349 = vld [vmem:[#allocation7 + $0x334] sm:$0xf]
    %v350 = vld [vmem:[#allocation7 + $0x338] sm:$0xf]
    %v351 = vld [vmem:[#allocation7 + $0x33c] sm:$0xf]
    %v352 = vld [vmem:[#allocation7 + $0x340] sm:$0xf]
    %v353 = vld [vmem:[#allocation7 + $0x344] sm:$0xf]
    %v354 = vld [vmem:[#allocation7 + $0x348] sm:$0xf]
    %v355 = vld [vmem:[#allocation7 + $0x34c] sm:$0xf]
    %v356 = vld [vmem:[#allocation7 + $0x350] sm:$0xf]
    %v357 = vld [vmem:[#allocation7 + $0x354] sm:$0xf]
    %v358 = vld [vmem:[#allocation7 + $0x358] sm:$0xf]
    %v359 = vld [vmem:[#allocation7 + $0x35c] sm:$0xf]
    %v360 = vld [vmem:[#allocation7 + $0x360] sm:$0xf]
    %v361 = vld [vmem:[#allocation7 + $0x364] sm:$0xf]
    %v362 = vld [vmem:[#allocation7 + $0x368] sm:$0xf]
    %v363 = vld [vmem:[#allocation7 + $0x36c] sm:$0xf]
    %v364 = vld [vmem:[#allocation7 + $0x370] sm:$0xf]
    %v365 = vld [vmem:[#allocation7 + $0x374] sm:$0xf]
    %v366 = vld [vmem:[#allocation7 + $0x378] sm:$0xf]
    %v367 = vld [vmem:[#allocation7 + $0x37c] sm:$0xf]
    %v368 = vld [vmem:[#allocation7 + $0x380] sm:$0xf]
    %v369 = vld [vmem:[#allocation7 + $0x384] sm:$0xf]
    %v370 = vld [vmem:[#allocation7 + $0x388] sm:$0xf]
    %v371 = vld [vmem:[#allocation7 + $0x38c] sm:$0xf]
    %v372 = vld [vmem:[#allocation7 + $0x390] sm:$0xf]
    %v373 = vld [vmem:[#allocation7 + $0x394] sm:$0xf]
    %v374 = vld [vmem:[#allocation7 + $0x398] sm:$0xf]
    %v375 = vld [vmem:[#allocation7 + $0x39c] sm:$0xf]
    %v376 = vld [vmem:[#allocation7 + $0x3a0] sm:$0xf]
    %v377 = vld [vmem:[#allocation7 + $0x3a4] sm:$0xf]
    %v378 = vld [vmem:[#allocation7 + $0x3a8] sm:$0xf]
    %v379 = vld [vmem:[#allocation7 + $0x3ac] sm:$0xf]
    %v380 = vld [vmem:[#allocation7 + $0x3b0] sm:$0xf]
    %v381 = vld [vmem:[#allocation7 + $0x3b4] sm:$0xf]
    %v382 = vld [vmem:[#allocation7 + $0x3b8] sm:$0xf]
    %v383 = vld [vmem:[#allocation7 + $0x3bc] sm:$0xf]
    %v384 = vld [vmem:[#allocation7 + $0x3c0] sm:$0xf]
    %v385 = vld [vmem:[#allocation7 + $0x3c4] sm:$0xf]
    %v386 = vld [vmem:[#allocation7 + $0x3c8] sm:$0xf]
    %v387 = vld [vmem:[#allocation7 + $0x3cc] sm:$0xf]
    %v388 = vld [vmem:[#allocation7 + $0x3d0] sm:$0xf]
    %v389 = vld [vmem:[#allocation7 + $0x3d4] sm:$0xf]
    %v390 = vld [vmem:[#allocation7 + $0x3d8] sm:$0xf]
    %v391 = vld [vmem:[#allocation7 + $0x3dc] sm:$0xf]
    %v392 = vld [vmem:[#allocation7 + $0x3e0] sm:$0xf]
    %v393 = vld [vmem:[#allocation7 + $0x3e4] sm:$0xf]
    %v394 = vld [vmem:[#allocation7 + $0x3e8] sm:$0xf]
    %v395 = vld [vmem:[#allocation7 + $0x3ec] sm:$0xf]
    %v396 = vld [vmem:[#allocation7 + $0x3f0] sm:$0xf]
    %v397 = vld [vmem:[#allocation7 + $0x3f4] sm:$0xf]
    %v398 = vld [vmem:[#allocation7 + $0x3f8] sm:$0xf]
    %v399 = vld [vmem:[#allocation7 + $0x3fc] sm:$0xf]
    %v400 = vld [vmem:[#allocation7 + $0x400] sm:$0xf]
    %v401 = vld [vmem:[#allocation7 + $0x404] sm:$0xf]
    %v402 = vld [vmem:[#allocation7 + $0x408] sm:$0xf]
    %v403 = vld [vmem:[#allocation7 + $0x40c] sm:$0xf]
    %v404 = vld [vmem:[#allocation7 + $0x410] sm:$0xf]
    %v405 = vld [vmem:[#allocation7 + $0x414] sm:$0xf]
    %v406 = vld [vmem:[#allocation7 + $0x418] sm:$0xf]
    %v407 = vld [vmem:[#allocation7 + $0x41c] sm:$0xf]
    %v408 = vld [vmem:[#allocation7 + $0x420] sm:$0xf]
    %v409 = vld [vmem:[#allocation7 + $0x424] sm:$0xf]
    %v410 = vld [vmem:[#allocation7 + $0x428] sm:$0xf]
    %v411 = vld [vmem:[#allocation7 + $0x42c] sm:$0xf]
    %v412 = vld [vmem:[#allocation7 + $0x430] sm:$0xf]
    %v413 = vld [vmem:[#allocation7 + $0x434] sm:$0xf]
    %v414 = vld [vmem:[#allocation7 + $0x438] sm:$0xf]
    %v415 = vld [vmem:[#allocation7 + $0x43c] sm:$0xf]
    %v416 = vld [vmem:[#allocation7 + $0x440] sm:$0xf]
    %v417 = vld [vmem:[#allocation7 + $0x444] sm:$0xf]
    %v418 = vld [vmem:[#allocation7 + $0x448] sm:$0xf]
    %v419 = vld [vmem:[#allocation7 + $0x44c] sm:$0xf]
    %v420 = vld [vmem:[#allocation7 + $0x450] sm:$0xf]
    %v421 = vld [vmem:[#allocation7 + $0x454] sm:$0xf]
    %v422 = vld [vmem:[#allocation7 + $0x458] sm:$0xf]
    %v423 = vld [vmem:[#allocation7 + $0x45c] sm:$0xf]
    %v424 = vld [vmem:[#allocation7 + $0x460] sm:$0xf]
    %v425 = vld [vmem:[#allocation7 + $0x464] sm:$0xf]
    %v426 = vld [vmem:[#allocation7 + $0x468] sm:$0xf]
    %v427 = vld [vmem:[#allocation7 + $0x46c] sm:$0xf]
    %v428 = vld [vmem:[#allocation7 + $0x470] sm:$0xf]
    %v429 = vld [vmem:[#allocation7 + $0x474] sm:$0xf]
    %v430 = vld [vmem:[#allocation7 + $0x478] sm:$0xf]
    %v431 = vld [vmem:[#allocation7 + $0x47c] sm:$0xf]
    %v432 = vld [vmem:[#allocation7 + $0x480] sm:$0xf]
    %v433 = vld [vmem:[#allocation7 + $0x484] sm:$0xf]
    %v434 = vld [vmem:[#allocation7 + $0x488] sm:$0xf]
    %v435 = vld [vmem:[#allocation7 + $0x48c] sm:$0xf]
    %v436 = vld [vmem:[#allocation7 + $0x490] sm:$0xf]
    %v437 = vld [vmem:[#allocation7 + $0x494] sm:$0xf]
    %v438 = vld [vmem:[#allocation7 + $0x498] sm:$0xf]
    %v439 = vld [vmem:[#allocation7 + $0x49c] sm:$0xf]
    %v440 = vld [vmem:[#allocation7 + $0x4a0] sm:$0xf]
    %v441 = vld [vmem:[#allocation7 + $0x4a4] sm:$0xf]
    %v442 = vld [vmem:[#allocation7 + $0x4a8] sm:$0xf]
    %v443 = vld [vmem:[#allocation7 + $0x4ac] sm:$0xf]
    %v444 = vld [vmem:[#allocation7 + $0x4b0] sm:$0xf]
    %v445 = vld [vmem:[#allocation7 + $0x4b4] sm:$0xf]
    %v446 = vld [vmem:[#allocation7 + $0x4b8] sm:$0xf]
    %v447 = vld [vmem:[#allocation7 + $0x4bc] sm:$0xf]
    %v448 = vld [vmem:[#allocation7 + $0x4c0] sm:$0xf]
    %v449 = vld [vmem:[#allocation7 + $0x4c4] sm:$0xf]
    %v450 = vld [vmem:[#allocation7 + $0x4c8] sm:$0xf]
    %v451 = vld [vmem:[#allocation7 + $0x4cc] sm:$0xf]
    %v452 = vld [vmem:[#allocation7 + $0x4d0] sm:$0xf]
    %v453 = vld [vmem:[#allocation7 + $0x4d4] sm:$0xf]
    %v454 = vld [vmem:[#allocation7 + $0x4d8] sm:$0xf]
    %v455 = vld [vmem:[#allocation7 + $0x4dc] sm:$0xf]
    %v456 = vld [vmem:[#allocation7 + $0x4e0] sm:$0xf]
    %v457 = vld [vmem:[#allocation7 + $0x4e4] sm:$0xf]
    %v458 = vld [vmem:[#allocation7 + $0x4e8] sm:$0xf]
    %v459 = vld [vmem:[#allocation7 + $0x4ec] sm:$0xf]
    %v460 = vld [vmem:[#allocation7 + $0x4f0] sm:$0xf]
    %v461 = vld [vmem:[#allocation7 + $0x4f4] sm:$0xf]
    %v462 = vld [vmem:[#allocation7 + $0x4f8] sm:$0xf]
    %v463 = vld [vmem:[#allocation7 + $0x4fc] sm:$0xf]
    %v464 = vld [vmem:[#allocation7 + $0x500] sm:$0xf]
    %v465 = vld [vmem:[#allocation7 + $0x504] sm:$0xf]
    %v466 = vld [vmem:[#allocation7 + $0x508] sm:$0xf]
    %v467 = vld [vmem:[#allocation7 + $0x50c] sm:$0xf]
    %v468 = vld [vmem:[#allocation7 + $0x510] sm:$0xf]
    %v469 = vld [vmem:[#allocation7 + $0x514] sm:$0xf]
    %v470 = vld [vmem:[#allocation7 + $0x518] sm:$0xf]
    %v471 = vld [vmem:[#allocation7 + $0x51c] sm:$0xf]
    %v472 = vld [vmem:[#allocation7 + $0x520] sm:$0xf]
    %v473 = vld [vmem:[#allocation7 + $0x524] sm:$0xf]
    %v474 = vld [vmem:[#allocation7 + $0x528] sm:$0xf]
    %v475 = vld [vmem:[#allocation7 + $0x52c] sm:$0xf]
    %v476 = vld [vmem:[#allocation7 + $0x530] sm:$0xf]
    %v477 = vld [vmem:[#allocation7 + $0x534] sm:$0xf]
    %v478 = vld [vmem:[#allocation7 + $0x538] sm:$0xf]
    %v479 = vld [vmem:[#allocation7 + $0x53c] sm:$0xf]
    %s480 = sld [smem:[#allocation2]]
    %v481 = vstv %s480
    %v818 = vunpack.c.l.b16 %v144
    %v819 = vunpack.c.l.b16 %v145
    %v820 = vunpack.c.l.b16 %v146
    %v821 = vunpack.c.l.b16 %v147
    %v822 = vunpack.c.l.b16 %v148
    %v823 = vunpack.c.l.b16 %v149
    %v824 = vunpack.c.l.b16 %v150
    %v825 = vunpack.c.l.b16 %v151
    %v826 = vunpack.c.l.b16 %v152
    %v827 = vunpack.c.l.b16 %v153
    %v828 = vunpack.c.l.b16 %v154
    %v829 = vunpack.c.l.b16 %v155
    %v830 = vunpack.c.l.b16 %v156
    %v831 = vunpack.c.l.b16 %v157
    %v832 = vunpack.c.l.b16 %v158
    %v833 = vunpack.c.l.b16 %v159
    %v834 = vunpack.c.l.b16 %v160
    %v835 = vunpack.c.l.b16 %v161
    %v836 = vunpack.c.l.b16 %v162
    %v837 = vunpack.c.l.b16 %v163
    %v838 = vunpack.c.l.b16 %v164
    %v839 = vunpack.c.l.b16 %v165
    %v840 = vunpack.c.l.b16 %v166
    %v841 = vunpack.c.l.b16 %v167
    %v842 = vunpack.c.l.b16 %v168
    %v843 = vunpack.c.l.b16 %v169
    %v844 = vunpack.c.l.b16 %v170
    %v845 = vunpack.c.l.b16 %v171
    %v846 = vunpack.c.l.b16 %v172
    %v847 = vunpack.c.l.b16 %v173
    %v848 = vunpack.c.l.b16 %v174
    %v849 = vunpack.c.l.b16 %v175
    %v850 = vunpack.c.l.b16 %v176
    %v851 = vunpack.c.l.b16 %v177
    %v852 = vunpack.c.l.b16 %v178
    %v853 = vunpack.c.l.b16 %v179
    %v854 = vunpack.c.l.b16 %v180
    %v855 = vunpack.c.l.b16 %v181
    %v856 = vunpack.c.l.b16 %v182
    %v857 = vunpack.c.l.b16 %v183
    %v858 = vunpack.c.l.b16 %v184
    %v859 = vunpack.c.l.b16 %v185
    %v860 = vunpack.c.l.b16 %v186
    %v861 = vunpack.c.l.b16 %v187
    %v862 = vunpack.c.l.b16 %v188
    %v863 = vunpack.c.l.b16 %v189
    %v864 = vunpack.c.l.b16 %v190
    %v865 = vunpack.c.l.b16 %v191
    %v866 = vunpack.c.l.b16 %v192
    %v867 = vunpack.c.l.b16 %v193
    %v868 = vunpack.c.l.b16 %v194
    %v869 = vunpack.c.l.b16 %v195
    %v870 = vunpack.c.l.b16 %v196
    %v871 = vunpack.c.l.b16 %v197
    %v872 = vunpack.c.l.b16 %v198
    %v873 = vunpack.c.l.b16 %v199
    %v874 = vunpack.c.l.b16 %v200
    %v875 = vunpack.c.l.b16 %v201
    %v876 = vunpack.c.l.b16 %v202
    %v877 = vunpack.c.l.b16 %v203
    %v878 = vunpack.c.l.b16 %v204
    %v879 = vunpack.c.l.b16 %v205
    %v880 = vunpack.c.l.b16 %v206
    %v881 = vunpack.c.l.b16 %v207
    %v882 = vunpack.c.l.b16 %v208
    %v883 = vunpack.c.l.b16 %v209
    %v884 = vunpack.c.l.b16 %v210
    %v885 = vunpack.c.l.b16 %v211
    %v886 = vunpack.c.l.b16 %v212
    %v887 = vunpack.c.l.b16 %v213
    %v888 = vunpack.c.l.b16 %v214
    %v889 = vunpack.c.l.b16 %v215
    %v890 = vunpack.c.l.b16 %v216
    %v891 = vunpack.c.l.b16 %v217
    %v892 = vunpack.c.l.b16 %v218
    %v893 = vunpack.c.l.b16 %v219
    %v894 = vunpack.c.l.b16 %v220
    %v895 = vunpack.c.l.b16 %v221
    %v896 = vunpack.c.l.b16 %v222
    %v897 = vunpack.c.l.b16 %v223
    %v898 = vunpack.c.l.b16 %v224
    %v899 = vunpack.c.l.b16 %v225
    %v900 = vunpack.c.l.b16 %v226
    %v901 = vunpack.c.l.b16 %v227
    %v902 = vunpack.c.l.b16 %v228
    %v903 = vunpack.c.l.b16 %v229
    %v904 = vunpack.c.l.b16 %v230
    %v905 = vunpack.c.l.b16 %v231
    %v906 = vunpack.c.l.b16 %v232
    %v907 = vunpack.c.l.b16 %v233
    %v908 = vunpack.c.l.b16 %v234
    %v909 = vunpack.c.l.b16 %v235
    %v910 = vunpack.c.l.b16 %v236
    %v911 = vunpack.c.l.b16 %v237
    %v912 = vunpack.c.l.b16 %v238
    %v913 = vunpack.c.l.b16 %v239
    %v914 = vunpack.c.l.b16 %v240
    %v915 = vunpack.c.l.b16 %v241
    %v916 = vunpack.c.l.b16 %v242
    %v917 = vunpack.c.l.b16 %v243
    %v918 = vunpack.c.l.b16 %v244
    %v919 = vunpack.c.l.b16 %v245
    %v920 = vunpack.c.l.b16 %v246
    %v921 = vunpack.c.l.b16 %v247
    %v922 = vunpack.c.l.b16 %v248
    %v923 = vunpack.c.l.b16 %v249
    %v924 = vunpack.c.l.b16 %v250
    %v925 = vunpack.c.l.b16 %v251
    %v926 = vunpack.c.l.b16 %v252
    %v927 = vunpack.c.l.b16 %v253
    %v928 = vunpack.c.l.b16 %v254
    %v929 = vunpack.c.l.b16 %v255
    %v930 = vunpack.c.l.b16 %v256
    %v931 = vunpack.c.l.b16 %v257
    %v932 = vunpack.c.l.b16 %v258
    %v933 = vunpack.c.l.b16 %v259
    %v934 = vunpack.c.l.b16 %v260
    %v935 = vunpack.c.l.b16 %v261
    %v936 = vunpack.c.l.b16 %v262
    %v937 = vunpack.c.l.b16 %v263
    %v938 = vunpack.c.l.b16 %v264
    %v939 = vunpack.c.l.b16 %v265
    %v940 = vunpack.c.l.b16 %v266
    %v941 = vunpack.c.l.b16 %v267
    %v942 = vunpack.c.l.b16 %v268
    %v943 = vunpack.c.l.b16 %v269
    %v944 = vunpack.c.l.b16 %v270
    %v945 = vunpack.c.l.b16 %v271
    %v946 = vunpack.c.l.b16 %v272
    %v947 = vunpack.c.l.b16 %v273
    %v948 = vunpack.c.l.b16 %v274
    %v949 = vunpack.c.l.b16 %v275
    %v950 = vunpack.c.l.b16 %v276
    %v951 = vunpack.c.l.b16 %v277
    %v952 = vunpack.c.l.b16 %v278
    %v953 = vunpack.c.l.b16 %v279
    %v954 = vunpack.c.l.b16 %v280
    %v955 = vunpack.c.l.b16 %v281
    %v956 = vunpack.c.l.b16 %v282
    %v957 = vunpack.c.l.b16 %v283
    %v958 = vunpack.c.l.b16 %v284
    %v959 = vunpack.c.l.b16 %v285
    %v960 = vunpack.c.l.b16 %v286
    %v961 = vunpack.c.l.b16 %v287
    %v962 = vunpack.c.l.b16 %v288
    %v963 = vunpack.c.l.b16 %v289
    %v964 = vunpack.c.l.b16 %v290
    %v965 = vunpack.c.l.b16 %v291
    %v966 = vunpack.c.l.b16 %v292
    %v967 = vunpack.c.l.b16 %v293
    %v968 = vunpack.c.l.b16 %v294
    %v969 = vunpack.c.l.b16 %v295
    %v970 = vunpack.c.l.b16 %v296
    %v971 = vunpack.c.l.b16 %v297
    %v972 = vunpack.c.l.b16 %v298
    %v973 = vunpack.c.l.b16 %v299
    %v974 = vunpack.c.l.b16 %v300
    %v975 = vunpack.c.l.b16 %v301
    %v976 = vunpack.c.l.b16 %v302
    %v977 = vunpack.c.l.b16 %v303
    %v978 = vunpack.c.l.b16 %v304
    %v979 = vunpack.c.l.b16 %v305
    %v980 = vunpack.c.l.b16 %v306
    %v981 = vunpack.c.l.b16 %v307
    %v982 = vunpack.c.l.b16 %v308
    %v983 = vunpack.c.l.b16 %v309
    %v984 = vunpack.c.l.b16 %v310
    %v985 = vunpack.c.l.b16 %v311
    %v986 = vunpack.c.l.b16 %v312
    %v987 = vunpack.c.l.b16 %v313
    %v988 = vunpack.c.l.b16 %v314
    %v989 = vunpack.c.l.b16 %v315
    %v990 = vunpack.c.l.b16 %v316
    %v991 = vunpack.c.l.b16 %v317
    %v992 = vunpack.c.l.b16 %v318
    %v993 = vunpack.c.l.b16 %v319
    %v994 = vunpack.c.l.b16 %v320
    %v995 = vunpack.c.l.b16 %v321
    %v996 = vunpack.c.l.b16 %v322
    %v997 = vunpack.c.l.b16 %v323
    %v998 = vunpack.c.l.b16 %v324
    %v999 = vunpack.c.l.b16 %v325
    %v1000 = vunpack.c.l.b16 %v326
    %v1001 = vunpack.c.l.b16 %v327
    %v1002 = vunpack.c.l.b16 %v328
    %v1003 = vunpack.c.l.b16 %v329
    %v1004 = vunpack.c.l.b16 %v330
    %v1005 = vunpack.c.l.b16 %v331
    %v1006 = vunpack.c.l.b16 %v332
    %v1007 = vunpack.c.l.b16 %v333
    %v1008 = vunpack.c.l.b16 %v334
    %v1009 = vunpack.c.l.b16 %v335
    %v1010 = vunpack.c.l.b16 %v336
    %v1011 = vunpack.c.l.b16 %v337
    %v1012 = vunpack.c.l.b16 %v338
    %v1013 = vunpack.c.l.b16 %v339
    %v1014 = vunpack.c.l.b16 %v340
    %v1015 = vunpack.c.l.b16 %v341
    %v1016 = vunpack.c.l.b16 %v342
    %v1017 = vunpack.c.l.b16 %v343
    %v1018 = vunpack.c.l.b16 %v344
    %v1019 = vunpack.c.l.b16 %v345
    %v1020 = vunpack.c.l.b16 %v346
    %v1021 = vunpack.c.l.b16 %v347
    %v1022 = vunpack.c.l.b16 %v348
    %v1023 = vunpack.c.l.b16 %v349
    %v1024 = vunpack.c.l.b16 %v350
    %v1025 = vunpack.c.l.b16 %v351
    %v1026 = vunpack.c.l.b16 %v352
    %v1027 = vunpack.c.l.b16 %v353
    %v1028 = vunpack.c.l.b16 %v354
    %v1029 = vunpack.c.l.b16 %v355
    %v1030 = vunpack.c.l.b16 %v356
    %v1031 = vunpack.c.l.b16 %v357
    %v1032 = vunpack.c.l.b16 %v358
    %v1033 = vunpack.c.l.b16 %v359
    %v1034 = vunpack.c.l.b16 %v360
    %v1035 = vunpack.c.l.b16 %v361
    %v1036 = vunpack.c.l.b16 %v362
    %v1037 = vunpack.c.l.b16 %v363
    %v1038 = vunpack.c.l.b16 %v364
    %v1039 = vunpack.c.l.b16 %v365
    %v1040 = vunpack.c.l.b16 %v366
    %v1041 = vunpack.c.l.b16 %v367
    %v1042 = vunpack.c.l.b16 %v368
    %v1043 = vunpack.c.l.b16 %v369
    %v1044 = vunpack.c.l.b16 %v370
    %v1045 = vunpack.c.l.b16 %v371
    %v1046 = vunpack.c.l.b16 %v372
    %v1047 = vunpack.c.l.b16 %v373
    %v1048 = vunpack.c.l.b16 %v374
    %v1049 = vunpack.c.l.b16 %v375
    %v1050 = vunpack.c.l.b16 %v376
    %v1051 = vunpack.c.l.b16 %v377
    %v1052 = vunpack.c.l.b16 %v378
    %v1053 = vunpack.c.l.b16 %v379
    %v1054 = vunpack.c.l.b16 %v380
    %v1055 = vunpack.c.l.b16 %v381
    %v1056 = vunpack.c.l.b16 %v382
    %v1057 = vunpack.c.l.b16 %v383
    %v1058 = vunpack.c.l.b16 %v384
    %v1059 = vunpack.c.l.b16 %v385
    %v1060 = vunpack.c.l.b16 %v386
    %v1061 = vunpack.c.l.b16 %v387
    %v1062 = vunpack.c.l.b16 %v388
    %v1063 = vunpack.c.l.b16 %v389
    %v1064 = vunpack.c.l.b16 %v390
    %v1065 = vunpack.c.l.b16 %v391
    %v1066 = vunpack.c.l.b16 %v392
    %v1067 = vunpack.c.l.b16 %v393
    %v1068 = vunpack.c.l.b16 %v394
    %v1069 = vunpack.c.l.b16 %v395
    %v1070 = vunpack.c.l.b16 %v396
    %v1071 = vunpack.c.l.b16 %v397
    %v1072 = vunpack.c.l.b16 %v398
    %v1073 = vunpack.c.l.b16 %v399
    %v1074 = vunpack.c.l.b16 %v400
    %v1075 = vunpack.c.l.b16 %v401
    %v1076 = vunpack.c.l.b16 %v402
    %v1077 = vunpack.c.l.b16 %v403
    %v1078 = vunpack.c.l.b16 %v404
    %v1079 = vunpack.c.l.b16 %v405
    %v1080 = vunpack.c.l.b16 %v406
    %v1081 = vunpack.c.l.b16 %v407
    %v1082 = vunpack.c.l.b16 %v408
    %v1083 = vunpack.c.l.b16 %v409
    %v1084 = vunpack.c.l.b16 %v410
    %v1085 = vunpack.c.l.b16 %v411
    %v1086 = vunpack.c.l.b16 %v412
    %v1087 = vunpack.c.l.b16 %v413
    %v1088 = vunpack.c.l.b16 %v414
    %v1089 = vunpack.c.l.b16 %v415
    %v1090 = vunpack.c.l.b16 %v416
    %v1091 = vunpack.c.l.b16 %v417
    %v1092 = vunpack.c.l.b16 %v418
    %v1093 = vunpack.c.l.b16 %v419
    %v1094 = vunpack.c.l.b16 %v420
    %v1095 = vunpack.c.l.b16 %v421
    %v1096 = vunpack.c.l.b16 %v422
    %v1097 = vunpack.c.l.b16 %v423
    %v1098 = vunpack.c.l.b16 %v424
    %v1099 = vunpack.c.l.b16 %v425
    %v1100 = vunpack.c.l.b16 %v426
    %v1101 = vunpack.c.l.b16 %v427
    %v1102 = vunpack.c.l.b16 %v428
    %v1103 = vunpack.c.l.b16 %v429
    %v1104 = vunpack.c.l.b16 %v430
    %v1105 = vunpack.c.l.b16 %v431
    %v1106 = vunpack.c.l.b16 %v432
    %v1107 = vunpack.c.l.b16 %v433
    %v1108 = vunpack.c.l.b16 %v434
    %v1109 = vunpack.c.l.b16 %v435
    %v1110 = vunpack.c.l.b16 %v436
    %v1111 = vunpack.c.l.b16 %v437
    %v1112 = vunpack.c.l.b16 %v438
    %v1113 = vunpack.c.l.b16 %v439
    %v1114 = vunpack.c.l.b16 %v440
    %v1115 = vunpack.c.l.b16 %v441
    %v1116 = vunpack.c.l.b16 %v442
    %v1117 = vunpack.c.l.b16 %v443
    %v1118 = vunpack.c.l.b16 %v444
    %v1119 = vunpack.c.l.b16 %v445
    %v1120 = vunpack.c.l.b16 %v446
    %v1121 = vunpack.c.l.b16 %v447
    %v1122 = vunpack.c.l.b16 %v448
    %v1123 = vunpack.c.l.b16 %v449
    %v1124 = vunpack.c.l.b16 %v450
    %v1125 = vunpack.c.l.b16 %v451
    %v1126 = vunpack.c.l.b16 %v452
    %v1127 = vunpack.c.l.b16 %v453
    %v1128 = vunpack.c.l.b16 %v454
    %v1129 = vunpack.c.l.b16 %v455
    %v1130 = vunpack.c.l.b16 %v456
    %v1131 = vunpack.c.l.b16 %v457
    %v1132 = vunpack.c.l.b16 %v458
    %v1133 = vunpack.c.l.b16 %v459
    %v1134 = vunpack.c.l.b16 %v460
    %v1135 = vunpack.c.l.b16 %v461
    %v1136 = vunpack.c.l.b16 %v462
    %v1137 = vunpack.c.l.b16 %v463
    %v1138 = vunpack.c.l.b16 %v464
    %v1139 = vunpack.c.l.b16 %v465
    %v1140 = vunpack.c.l.b16 %v466
    %v1141 = vunpack.c.l.b16 %v467
    %v1142 = vunpack.c.l.b16 %v468
    %v1143 = vunpack.c.l.b16 %v469
    %v1144 = vunpack.c.l.b16 %v470
    %v1145 = vunpack.c.l.b16 %v471
    %v1146 = vunpack.c.l.b16 %v472
    %v1147 = vunpack.c.l.b16 %v473
    %v1148 = vunpack.c.l.b16 %v474
    %v1149 = vunpack.c.l.b16 %v475
    %v1150 = vunpack.c.l.b16 %v476
    %v1151 = vunpack.c.l.b16 %v477
    %v1152 = vunpack.c.l.b16 %v478
    %v1153 = vunpack.c.l.b16 %v479
    %v1154 = vpack.c.b16 %v819, %v818
    %v1155 = vpack.c.b16 %v821, %v820
    %v1156 = vpack.c.b16 %v823, %v822
    %v1157 = vpack.c.b16 %v825, %v824
    %v1158 = vpack.c.b16 %v827, %v826
    %v1159 = vpack.c.b16 %v829, %v828
    %v1160 = vpack.c.b16 %v831, %v830
    %v1161 = vpack.c.b16 %v833, %v832
    %v1162 = vpack.c.b16 %v835, %v834
    %v1163 = vpack.c.b16 %v837, %v836
    %v1164 = vpack.c.b16 %v839, %v838
    %v1165 = vpack.c.b16 %v841, %v840
    %v1166 = vpack.c.b16 %v843, %v842
    %v1167 = vpack.c.b16 %v845, %v844
    %v1168 = vpack.c.b16 %v847, %v846
    %v1169 = vpack.c.b16 %v849, %v848
    %v1170 = vpack.c.b16 %v851, %v850
    %v1171 = vpack.c.b16 %v853, %v852
    %v1172 = vpack.c.b16 %v855, %v854
    %v1173 = vpack.c.b16 %v857, %v856
    %v1174 = vpack.c.b16 %v859, %v858
    %v1175 = vpack.c.b16 %v861, %v860
    %v1176 = vpack.c.b16 %v863, %v862
    %v1177 = vpack.c.b16 %v865, %v864
    %v1178 = vpack.c.b16 %v867, %v866
    %v1179 = vpack.c.b16 %v869, %v868
    %v1180 = vpack.c.b16 %v871, %v870
    %v1181 = vpack.c.b16 %v873, %v872
    %v1182 = vpack.c.b16 %v875, %v874
    %v1183 = vpack.c.b16 %v877, %v876
    %v1184 = vpack.c.b16 %v879, %v878
    %v1185 = vpack.c.b16 %v881, %v880
    %v1186 = vpack.c.b16 %v883, %v882
    %v1187 = vpack.c.b16 %v885, %v884
    %v1188 = vpack.c.b16 %v887, %v886
    %v1189 = vpack.c.b16 %v889, %v888
    %v1190 = vpack.c.b16 %v891, %v890
    %v1191 = vpack.c.b16 %v893, %v892
    %v1192 = vpack.c.b16 %v895, %v894
    %v1193 = vpack.c.b16 %v897, %v896
    %v1194 = vpack.c.b16 %v899, %v898
    %v1195 = vpack.c.b16 %v901, %v900
    %v1196 = vpack.c.b16 %v903, %v902
    %v1197 = vpack.c.b16 %v905, %v904
    %v1198 = vpack.c.b16 %v907, %v906
    %v1199 = vpack.c.b16 %v909, %v908
    %v1200 = vpack.c.b16 %v911, %v910
    %v1201 = vpack.c.b16 %v913, %v912
    %v1202 = vpack.c.b16 %v915, %v914
    %v1203 = vpack.c.b16 %v917, %v916
    %v1204 = vpack.c.b16 %v919, %v918
    %v1205 = vpack.c.b16 %v921, %v920
    %v1206 = vpack.c.b16 %v923, %v922
    %v1207 = vpack.c.b16 %v925, %v924
    %v1208 = vpack.c.b16 %v927, %v926
    %v1209 = vpack.c.b16 %v929, %v928
    %v1210 = vpack.c.b16 %v931, %v930
    %v1211 = vpack.c.b16 %v933, %v932
    %v1212 = vpack.c.b16 %v935, %v934
    %v1213 = vpack.c.b16 %v937, %v936
    %v1214 = vpack.c.b16 %v939, %v938
    %v1215 = vpack.c.b16 %v941, %v940
    %v1216 = vpack.c.b16 %v943, %v942
    %v1217 = vpack.c.b16 %v945, %v944
    %v1218 = vpack.c.b16 %v947, %v946
    %v1219 = vpack.c.b16 %v949, %v948
    %v1220 = vpack.c.b16 %v951, %v950
    %v1221 = vpack.c.b16 %v953, %v952
    %v1222 = vpack.c.b16 %v955, %v954
    %v1223 = vpack.c.b16 %v957, %v956
    %v1224 = vpack.c.b16 %v959, %v958
    %v1225 = vpack.c.b16 %v961, %v960
    %v1226 = vpack.c.b16 %v963, %v962
    %v1227 = vpack.c.b16 %v965, %v964
    %v1228 = vpack.c.b16 %v967, %v966
    %v1229 = vpack.c.b16 %v969, %v968
    %v1230 = vpack.c.b16 %v971, %v970
    %v1231 = vpack.c.b16 %v973, %v972
    %v1232 = vpack.c.b16 %v975, %v974
    %v1233 = vpack.c.b16 %v977, %v976
    %v1234 = vpack.c.b16 %v979, %v978
    %v1235 = vpack.c.b16 %v981, %v980
    %v1236 = vpack.c.b16 %v983, %v982
    %v1237 = vpack.c.b16 %v985, %v984
    %v1238 = vpack.c.b16 %v987, %v986
    %v1239 = vpack.c.b16 %v989, %v988
    %v1240 = vpack.c.b16 %v991, %v990
    %v1241 = vpack.c.b16 %v993, %v992
    %v1242 = vpack.c.b16 %v995, %v994
    %v1243 = vpack.c.b16 %v997, %v996
    %v1244 = vpack.c.b16 %v999, %v998
    %v1245 = vpack.c.b16 %v1001, %v1000
    %v1246 = vpack.c.b16 %v1003, %v1002
    %v1247 = vpack.c.b16 %v1005, %v1004
    %v1248 = vpack.c.b16 %v1007, %v1006
    %v1249 = vpack.c.b16 %v1009, %v1008
    %v1250 = vpack.c.b16 %v1011, %v1010
    %v1251 = vpack.c.b16 %v1013, %v1012
    %v1252 = vpack.c.b16 %v1015, %v1014
    %v1253 = vpack.c.b16 %v1017, %v1016
    %v1254 = vpack.c.b16 %v1019, %v1018
    %v1255 = vpack.c.b16 %v1021, %v1020
    %v1256 = vpack.c.b16 %v1023, %v1022
    %v1257 = vpack.c.b16 %v1025, %v1024
    %v1258 = vpack.c.b16 %v1027, %v1026
    %v1259 = vpack.c.b16 %v1029, %v1028
    %v1260 = vpack.c.b16 %v1031, %v1030
    %v1261 = vpack.c.b16 %v1033, %v1032
    %v1262 = vpack.c.b16 %v1035, %v1034
    %v1263 = vpack.c.b16 %v1037, %v1036
    %v1264 = vpack.c.b16 %v1039, %v1038
    %v1265 = vpack.c.b16 %v1041, %v1040
    %v1266 = vpack.c.b16 %v1043, %v1042
    %v1267 = vpack.c.b16 %v1045, %v1044
    %v1268 = vpack.c.b16 %v1047, %v1046
    %v1269 = vpack.c.b16 %v1049, %v1048
    %v1270 = vpack.c.b16 %v1051, %v1050
    %v1271 = vpack.c.b16 %v1053, %v1052
    %v1272 = vpack.c.b16 %v1055, %v1054
    %v1273 = vpack.c.b16 %v1057, %v1056
    %v1274 = vpack.c.b16 %v1059, %v1058
    %v1275 = vpack.c.b16 %v1061, %v1060
    %v1276 = vpack.c.b16 %v1063, %v1062
    %v1277 = vpack.c.b16 %v1065, %v1064
    %v1278 = vpack.c.b16 %v1067, %v1066
    %v1279 = vpack.c.b16 %v1069, %v1068
    %v1280 = vpack.c.b16 %v1071, %v1070
    %v1281 = vpack.c.b16 %v1073, %v1072
    %v1282 = vpack.c.b16 %v1075, %v1074
    %v1283 = vpack.c.b16 %v1077, %v1076
    %v1284 = vpack.c.b16 %v1079, %v1078
    %v1285 = vpack.c.b16 %v1081, %v1080
    %v1286 = vpack.c.b16 %v1083, %v1082
    %v1287 = vpack.c.b16 %v1085, %v1084
    %v1288 = vpack.c.b16 %v1087, %v1086
    %v1289 = vpack.c.b16 %v1089, %v1088
    %v1290 = vpack.c.b16 %v1091, %v1090
    %v1291 = vpack.c.b16 %v1093, %v1092
    %v1292 = vpack.c.b16 %v1095, %v1094
    %v1293 = vpack.c.b16 %v1097, %v1096
    %v1294 = vpack.c.b16 %v1099, %v1098
    %v1295 = vpack.c.b16 %v1101, %v1100
    %v1296 = vpack.c.b16 %v1103, %v1102
    %v1297 = vpack.c.b16 %v1105, %v1104
    %v1298 = vpack.c.b16 %v1107, %v1106
    %v1299 = vpack.c.b16 %v1109, %v1108
    %v1300 = vpack.c.b16 %v1111, %v1110
    %v1301 = vpack.c.b16 %v1113, %v1112
    %v1302 = vpack.c.b16 %v1115, %v1114
    %v1303 = vpack.c.b16 %v1117, %v1116
    %v1304 = vpack.c.b16 %v1119, %v1118
    %v1305 = vpack.c.b16 %v1121, %v1120
    %v1306 = vpack.c.b16 %v1123, %v1122
    %v1307 = vpack.c.b16 %v1125, %v1124
    %v1308 = vpack.c.b16 %v1127, %v1126
    %v1309 = vpack.c.b16 %v1129, %v1128
    %v1310 = vpack.c.b16 %v1131, %v1130
    %v1311 = vpack.c.b16 %v1133, %v1132
    %v1312 = vpack.c.b16 %v1135, %v1134
    %v1313 = vpack.c.b16 %v1137, %v1136
    %v1314 = vpack.c.b16 %v1139, %v1138
    %v1315 = vpack.c.b16 %v1141, %v1140
    %v1316 = vpack.c.b16 %v1143, %v1142
    %v1317 = vpack.c.b16 %v1145, %v1144
    %v1318 = vpack.c.b16 %v1147, %v1146
    %v1319 = vpack.c.b16 %v1149, %v1148
    %v1320 = vpack.c.b16 %v1151, %v1150
    %v1321 = vpack.c.b16 %v1153, %v1152
    %1490 = vmatpush.bf16.msra.mxu0 %v1161
    %1491 = vmatpush.bf16.msra.mxu0 %v1160
    %1492 = vmatpush.bf16.msra.mxu0 %v1159
    %1493 = vmatpush.bf16.msra.mxu0 %v1158
    %1494 = vmatpush.bf16.msra.mxu0 %v1157
    %1495 = vmatpush.bf16.msra.mxu0 %v1156
    %1496 = vmatpush.bf16.msra.mxu0 %v1155
    %1497 = vmatpush.bf16.msra.mxu0 %v1154
    %1498 = vmatmul.bf16.gmra.mxu0 %v123
    %v1499 = vpop.f32.mrf.mxu0
    %v1500 = vadd.f32 %v481, %v1499
    %v1501 = vpop.f32.mrf.mxu0
    %v1502 = vadd.f32 %v481, %v1501
    %1503 = vdwg.mxu0
    %1504 = vmatpush.bf16.msra.mxu0 %v1169
    %1505 = vmatpush.bf16.msra.mxu0 %v1168
    %1506 = vmatpush.bf16.msra.mxu0 %v1167
    %1507 = vmatpush.bf16.msra.mxu0 %v1166
    %1508 = vmatpush.bf16.msra.mxu0 %v1165
    %1509 = vmatpush.bf16.msra.mxu0 %v1164
    %1510 = vmatpush.bf16.msra.mxu0 %v1163
    %1511 = vmatpush.bf16.msra.mxu0 %v1162
    %1512 = vmatmul.bf16.gmra.mxu0 %v124
    %v1513 = vpop.f32.mrf.mxu0
    %v1514 = vadd.f32 %v1500, %v1513
    %v1515 = vpop.f32.mrf.mxu0
    %v1516 = vadd.f32 %v1502, %v1515
    %1517 = vdwg.mxu0
    %1518 = vmatpush.bf16.msra.mxu0 %v1177
    %1519 = vmatpush.bf16.msra.mxu0 %v1176
    %1520 = vmatpush.bf16.msra.mxu0 %v1175
    %1521 = vmatpush.bf16.msra.mxu0 %v1174
    %1522 = vmatpush.bf16.msra.mxu0 %v1173
    %1523 = vmatpush.bf16.msra.mxu0 %v1172
    %1524 = vmatpush.bf16.msra.mxu0 %v1171
    %1525 = vmatpush.bf16.msra.mxu0 %v1170
    %1526 = vmatmul.bf16.gmra.mxu0 %v125
    %v1527 = vpop.f32.mrf.mxu0
    %v1528 = vadd.f32 %v1514, %v1527
    %v1529 = vpop.f32.mrf.mxu0
    %v1530 = vadd.f32 %v1516, %v1529
    %1531 = vdwg.mxu0
    %1532 = vmatpush.bf16.msra.mxu0 %v1185
    %1533 = vmatpush.bf16.msra.mxu0 %v1184
    %1534 = vmatpush.bf16.msra.mxu0 %v1183
    %1535 = vmatpush.bf16.msra.mxu0 %v1182
    %1536 = vmatpush.bf16.msra.mxu0 %v1181
    %1537 = vmatpush.bf16.msra.mxu0 %v1180
    %1538 = vmatpush.bf16.msra.mxu0 %v1179
    %1539 = vmatpush.bf16.msra.mxu0 %v1178
    %1540 = vmatmul.bf16.gmra.mxu0 %v126
    %v1541 = vpop.f32.mrf.mxu0
    %v1542 = vadd.f32 %v1528, %v1541
    %v1543 = vpop.f32.mrf.mxu0
    %v1544 = vadd.f32 %v1530, %v1543
    %1545 = vdwg.mxu0
    %1546 = vmatpush.bf16.msra.mxu0 %v1193
    %1547 = vmatpush.bf16.msra.mxu0 %v1192
    %1548 = vmatpush.bf16.msra.mxu0 %v1191
    %1549 = vmatpush.bf16.msra.mxu0 %v1190
    %1550 = vmatpush.bf16.msra.mxu0 %v1189
    %1551 = vmatpush.bf16.msra.mxu0 %v1188
    %1552 = vmatpush.bf16.msra.mxu0 %v1187
    %1553 = vmatpush.bf16.msra.mxu0 %v1186
    %1554 = vmatmul.bf16.gmra.mxu0 %v127
    %v1555 = vpop.f32.mrf.mxu0
    %v1556 = vadd.f32 %v1542, %v1555
    %v1557 = vpop.f32.mrf.mxu0
    %v1558 = vadd.f32 %v1544, %v1557
    %1559 = vdwg.mxu0
    %1560 = vmatpush.bf16.msra.mxu0 %v1201
    %1561 = vmatpush.bf16.msra.mxu0 %v1200
    %1562 = vmatpush.bf16.msra.mxu0 %v1199
    %1563 = vmatpush.bf16.msra.mxu0 %v1198
    %1564 = vmatpush.bf16.msra.mxu0 %v1197
    %1565 = vmatpush.bf16.msra.mxu0 %v1196
    %1566 = vmatpush.bf16.msra.mxu0 %v1195
    %1567 = vmatpush.bf16.msra.mxu0 %v1194
    %1568 = vmatmul.bf16.gmra.mxu0 %v128
    %v1569 = vpop.f32.mrf.mxu0
    %v1570 = vadd.f32 %v1556, %v1569
    %v1571 = vpop.f32.mrf.mxu0
    %v1572 = vadd.f32 %v1558, %v1571
    %1573 = vdwg.mxu0
    %1574 = vmatpush.bf16.msra.mxu0 %v1209
    %1575 = vmatpush.bf16.msra.mxu0 %v1208
    %1576 = vmatpush.bf16.msra.mxu0 %v1207
    %1577 = vmatpush.bf16.msra.mxu0 %v1206
    %1578 = vmatpush.bf16.msra.mxu0 %v1205
    %1579 = vmatpush.bf16.msra.mxu0 %v1204
    %1580 = vmatpush.bf16.msra.mxu0 %v1203
    %1581 = vmatpush.bf16.msra.mxu0 %v1202
    %1582 = vmatmul.bf16.gmra.mxu0 %v129
    %v1583 = vpop.f32.mrf.mxu0
    %v1584 = vadd.f32 %v1570, %v1583
    %v1585 = vpop.f32.mrf.mxu0
    %v1586 = vadd.f32 %v1572, %v1585
    %1587 = vdwg.mxu0
    %1588 = vmatpush.bf16.msra.mxu0 %v1217
    %1589 = vmatpush.bf16.msra.mxu0 %v1216
    %1590 = vmatpush.bf16.msra.mxu0 %v1215
    %1591 = vmatpush.bf16.msra.mxu0 %v1214
    %1592 = vmatpush.bf16.msra.mxu0 %v1213
    %1593 = vmatpush.bf16.msra.mxu0 %v1212
    %1594 = vmatpush.bf16.msra.mxu0 %v1211
    %1595 = vmatpush.bf16.msra.mxu0 %v1210
    %1596 = vmatmul.bf16.gmra.mxu0 %v130
    %v1597 = vpop.f32.mrf.mxu0
    %v1598 = vadd.f32 %v1584, %v1597
    %v1599 = vpop.f32.mrf.mxu0
    %v1600 = vadd.f32 %v1586, %v1599
    %1601 = vdwg.mxu0
    %1602 = vmatpush.bf16.msra.mxu0 %v1225
    %1603 = vmatpush.bf16.msra.mxu0 %v1224
    %1604 = vmatpush.bf16.msra.mxu0 %v1223
    %1605 = vmatpush.bf16.msra.mxu0 %v1222
    %1606 = vmatpush.bf16.msra.mxu0 %v1221
    %1607 = vmatpush.bf16.msra.mxu0 %v1220
    %1608 = vmatpush.bf16.msra.mxu0 %v1219
    %1609 = vmatpush.bf16.msra.mxu0 %v1218
    %1610 = vmatmul.bf16.gmra.mxu0 %v131
    %v1611 = vpop.f32.mrf.mxu0
    %v1612 = vadd.f32 %v1598, %v1611
    %v1613 = vpop.f32.mrf.mxu0
    %v1614 = vadd.f32 %v1600, %v1613
    %1615 = vdwg.mxu0
    %1616 = vmatpush.bf16.msra.mxu0 %v1233
    %1617 = vmatpush.bf16.msra.mxu0 %v1232
    %1618 = vmatpush.bf16.msra.mxu0 %v1231
    %1619 = vmatpush.bf16.msra.mxu0 %v1230
    %1620 = vmatpush.bf16.msra.mxu0 %v1229
    %1621 = vmatpush.bf16.msra.mxu0 %v1228
    %1622 = vmatpush.bf16.msra.mxu0 %v1227
    %1623 = vmatpush.bf16.msra.mxu0 %v1226
    %1624 = vmatmul.bf16.gmra.mxu0 %v132
    %v1625 = vpop.f32.mrf.mxu0
    %v1626 = vadd.f32 %v1612, %v1625
    %v1627 = vpop.f32.mrf.mxu0
    %v1628 = vadd.f32 %v1614, %v1627
    %1629 = vdwg.mxu0
    %1630 = vmatpush.bf16.msra.mxu0 %v1241
    %1631 = vmatpush.bf16.msra.mxu0 %v1240
    %1632 = vmatpush.bf16.msra.mxu0 %v1239
    %1633 = vmatpush.bf16.msra.mxu0 %v1238
    %1634 = vmatpush.bf16.msra.mxu0 %v1237
    %1635 = vmatpush.bf16.msra.mxu0 %v1236
    %1636 = vmatpush.bf16.msra.mxu0 %v1235
    %1637 = vmatpush.bf16.msra.mxu0 %v1234
    %1638 = vmatmul.bf16.gmra.mxu0 %v133
    %v1639 = vpop.f32.mrf.mxu0
    %v1640 = vadd.f32 %v1626, %v1639
    %v1641 = vpop.f32.mrf.mxu0
    %v1642 = vadd.f32 %v1628, %v1641
    %1643 = vdwg.mxu0
    %1644 = vmatpush.bf16.msra.mxu0 %v1249
    %1645 = vmatpush.bf16.msra.mxu0 %v1248
    %1646 = vmatpush.bf16.msra.mxu0 %v1247
    %1647 = vmatpush.bf16.msra.mxu0 %v1246
    %1648 = vmatpush.bf16.msra.mxu0 %v1245
    %1649 = vmatpush.bf16.msra.mxu0 %v1244
    %1650 = vmatpush.bf16.msra.mxu0 %v1243
    %1651 = vmatpush.bf16.msra.mxu0 %v1242
    %1652 = vmatmul.bf16.gmra.mxu0 %v134
    %v1653 = vpop.f32.mrf.mxu0
    %v1654 = vadd.f32 %v1640, %v1653
    %v1655 = vpop.f32.mrf.mxu0
    %v1656 = vadd.f32 %v1642, %v1655
    %1657 = vdwg.mxu0
    %1658 = vmatpush.bf16.msra.mxu0 %v1257
    %1659 = vmatpush.bf16.msra.mxu0 %v1256
    %1660 = vmatpush.bf16.msra.mxu0 %v1255
    %1661 = vmatpush.bf16.msra.mxu0 %v1254
    %1662 = vmatpush.bf16.msra.mxu0 %v1253
    %1663 = vmatpush.bf16.msra.mxu0 %v1252
    %1664 = vmatpush.bf16.msra.mxu0 %v1251
    %1665 = vmatpush.bf16.msra.mxu0 %v1250
    %1666 = vmatmul.bf16.gmra.mxu0 %v135
    %v1667 = vpop.f32.mrf.mxu0
    %v1668 = vadd.f32 %v1654, %v1667
    %v1669 = vpop.f32.mrf.mxu0
    %v1670 = vadd.f32 %v1656, %v1669
    %1671 = vdwg.mxu0
    %1672 = vmatpush.bf16.msra.mxu0 %v1265
    %1673 = vmatpush.bf16.msra.mxu0 %v1264
    %1674 = vmatpush.bf16.msra.mxu0 %v1263
    %1675 = vmatpush.bf16.msra.mxu0 %v1262
    %1676 = vmatpush.bf16.msra.mxu0 %v1261
    %1677 = vmatpush.bf16.msra.mxu0 %v1260
    %1678 = vmatpush.bf16.msra.mxu0 %v1259
    %1679 = vmatpush.bf16.msra.mxu0 %v1258
    %1680 = vmatmul.bf16.gmra.mxu0 %v136
    %v1681 = vpop.f32.mrf.mxu0
    %v1682 = vadd.f32 %v1668, %v1681
    %v1683 = vpop.f32.mrf.mxu0
    %v1684 = vadd.f32 %v1670, %v1683
    %1685 = vdwg.mxu0
    %1686 = vmatpush.bf16.msra.mxu0 %v1273
    %1687 = vmatpush.bf16.msra.mxu0 %v1272
    %1688 = vmatpush.bf16.msra.mxu0 %v1271
    %1689 = vmatpush.bf16.msra.mxu0 %v1270
    %1690 = vmatpush.bf16.msra.mxu0 %v1269
    %1691 = vmatpush.bf16.msra.mxu0 %v1268
    %1692 = vmatpush.bf16.msra.mxu0 %v1267
    %1693 = vmatpush.bf16.msra.mxu0 %v1266
    %1694 = vmatmul.bf16.gmra.mxu0 %v137
    %v1695 = vpop.f32.mrf.mxu0
    %v1696 = vadd.f32 %v1682, %v1695
    %v1697 = vpop.f32.mrf.mxu0
    %v1698 = vadd.f32 %v1684, %v1697
    %1699 = vdwg.mxu0
    %1700 = vmatpush.bf16.msra.mxu0 %v1281
    %1701 = vmatpush.bf16.msra.mxu0 %v1280
    %1702 = vmatpush.bf16.msra.mxu0 %v1279
    %1703 = vmatpush.bf16.msra.mxu0 %v1278
    %1704 = vmatpush.bf16.msra.mxu0 %v1277
    %1705 = vmatpush.bf16.msra.mxu0 %v1276
    %1706 = vmatpush.bf16.msra.mxu0 %v1275
    %1707 = vmatpush.bf16.msra.mxu0 %v1274
    %1708 = vmatmul.bf16.gmra.mxu0 %v138
    %v1709 = vpop.f32.mrf.mxu0
    %v1710 = vadd.f32 %v1696, %v1709
    %v1711 = vpop.f32.mrf.mxu0
    %v1712 = vadd.f32 %v1698, %v1711
    %1713 = vdwg.mxu0
    %1714 = vmatpush.bf16.msra.mxu0 %v1289
    %1715 = vmatpush.bf16.msra.mxu0 %v1288
    %1716 = vmatpush.bf16.msra.mxu0 %v1287
    %1717 = vmatpush.bf16.msra.mxu0 %v1286
    %1718 = vmatpush.bf16.msra.mxu0 %v1285
    %1719 = vmatpush.bf16.msra.mxu0 %v1284
    %1720 = vmatpush.bf16.msra.mxu0 %v1283
    %1721 = vmatpush.bf16.msra.mxu0 %v1282
    %1722 = vmatmul.bf16.gmra.mxu0 %v139
    %v1723 = vpop.f32.mrf.mxu0
    %v1724 = vadd.f32 %v1710, %v1723
    %v1725 = vpop.f32.mrf.mxu0
    %v1726 = vadd.f32 %v1712, %v1725
    %1727 = vdwg.mxu0
    %1728 = vmatpush.bf16.msra.mxu0 %v1297
    %1729 = vmatpush.bf16.msra.mxu0 %v1296
    %1730 = vmatpush.bf16.msra.mxu0 %v1295
    %1731 = vmatpush.bf16.msra.mxu0 %v1294
    %1732 = vmatpush.bf16.msra.mxu0 %v1293
    %1733 = vmatpush.bf16.msra.mxu0 %v1292
    %1734 = vmatpush.bf16.msra.mxu0 %v1291
    %1735 = vmatpush.bf16.msra.mxu0 %v1290
    %1736 = vmatmul.bf16.gmra.mxu0 %v140
    %v1737 = vpop.f32.mrf.mxu0
    %v1738 = vadd.f32 %v1724, %v1737
    %v1739 = vpop.f32.mrf.mxu0
    %v1740 = vadd.f32 %v1726, %v1739
    %1741 = vdwg.mxu0
    %1742 = vmatpush.bf16.msra.mxu0 %v1305
    %1743 = vmatpush.bf16.msra.mxu0 %v1304
    %1744 = vmatpush.bf16.msra.mxu0 %v1303
    %1745 = vmatpush.bf16.msra.mxu0 %v1302
    %1746 = vmatpush.bf16.msra.mxu0 %v1301
    %1747 = vmatpush.bf16.msra.mxu0 %v1300
    %1748 = vmatpush.bf16.msra.mxu0 %v1299
    %1749 = vmatpush.bf16.msra.mxu0 %v1298
    %1750 = vmatmul.bf16.gmra.mxu0 %v141
    %v1751 = vpop.f32.mrf.mxu0
    %v1752 = vadd.f32 %v1738, %v1751
    %v1753 = vpop.f32.mrf.mxu0
    %v1754 = vadd.f32 %v1740, %v1753
    %1755 = vdwg.mxu0
    %1756 = vmatpush.bf16.msra.mxu0 %v1313
    %1757 = vmatpush.bf16.msra.mxu0 %v1312
    %1758 = vmatpush.bf16.msra.mxu0 %v1311
    %1759 = vmatpush.bf16.msra.mxu0 %v1310
    %1760 = vmatpush.bf16.msra.mxu0 %v1309
    %1761 = vmatpush.bf16.msra.mxu0 %v1308
    %1762 = vmatpush.bf16.msra.mxu0 %v1307
    %1763 = vmatpush.bf16.msra.mxu0 %v1306
    %1764 = vmatmul.bf16.gmra.mxu0 %v142
    %v1765 = vpop.f32.mrf.mxu0
    %v1766 = vadd.f32 %v1752, %v1765
    %v1767 = vpop.f32.mrf.mxu0
    %v1768 = vadd.f32 %v1754, %v1767
    %1769 = vdwg.mxu0
    %1770 = vmatpush.bf16.msra.mxu0 %v1321
    %1771 = vmatpush.bf16.msra.mxu0 %v1320
    %1772 = vmatpush.bf16.msra.mxu0 %v1319
    %1773 = vmatpush.bf16.msra.mxu0 %v1318
    %1774 = vmatpush.bf16.msra.mxu0 %v1317
    %1775 = vmatpush.bf16.msra.mxu0 %v1316
    %1776 = vmatpush.bf16.msra.mxu0 %v1315
    %1777 = vmatpush.bf16.msra.mxu0 %v1314
    %1778 = vmatmul.bf16.gmra.mxu0 %v143
    %v1779 = vpop.f32.mrf.mxu0
    %v1780 = vadd.f32 %v1766, %v1779
    %v1781 = vpop.f32.mrf.mxu0
    %v1782 = vadd.f32 %v1768, %v1781
    %1783 = vdwg.mxu0
    %v1784 = vmax.f32 %v1780, 0.0
    %v1785 = vmax.f32 %v1782, 0.0
    %v1786 = vpack.c.bf16 %v1785, %v1784
    %v1787 = vld [vmem:[#allocation9] sm:$0xf]
    %v1788 = vld [vmem:[#allocation9 + $0x4] sm:$0xf]
    %v1789 = vld [vmem:[#allocation9 + $0x8] sm:$0xf]
    %v1790 = vld [vmem:[#allocation9 + $0xc] sm:$0xf]
    %v1791 = vld [vmem:[#allocation9 + $0x10] sm:$0xf]
    %v1792 = vld [vmem:[#allocation9 + $0x14] sm:$0xf]
    %v1793 = vld [vmem:[#allocation9 + $0x18] sm:$0xf]
    %v1794 = vld [vmem:[#allocation9 + $0x1c] sm:$0xf]
    %v1795 = vld [vmem:[#allocation9 + $0x20] sm:$0xf]
    %v1796 = vld [vmem:[#allocation9 + $0x24] sm:$0xf]
    %v1797 = vld [vmem:[#allocation9 + $0x28] sm:$0xf]
    %v1798 = vld [vmem:[#allocation9 + $0x2c] sm:$0xf]
    %v1799 = vld [vmem:[#allocation9 + $0x30] sm:$0xf]
    %v1800 = vld [vmem:[#allocation9 + $0x34] sm:$0xf]
    %v1801 = vld [vmem:[#allocation9 + $0x38] sm:$0xf]
    %v1802 = vld [vmem:[#allocation9 + $0x3c] sm:$0xf]
    %v1803 = vld [vmem:[%s4] sm:$0x1]
    %v1805 = vperm.slane %v1803, 0
    %v1823 = vunpack.c.l.b16 %v1787
    %v1824 = vunpack.c.l.b16 %v1788
    %v1825 = vunpack.c.l.b16 %v1789
    %v1826 = vunpack.c.l.b16 %v1790
    %v1827 = vunpack.c.l.b16 %v1791
    %v1828 = vunpack.c.l.b16 %v1792
    %v1829 = vunpack.c.l.b16 %v1793
    %v1830 = vunpack.c.l.b16 %v1794
    %v1831 = vunpack.c.l.b16 %v1795
    %v1832 = vunpack.c.l.b16 %v1796
    %v1833 = vunpack.c.l.b16 %v1797
    %v1834 = vunpack.c.l.b16 %v1798
    %v1835 = vunpack.c.l.b16 %v1799
    %v1836 = vunpack.c.l.b16 %v1800
    %v1837 = vunpack.c.l.b16 %v1801
    %v1838 = vunpack.c.l.b16 %v1802
    %v1839 = vpack.c.b16 %v1824, %v1823
    %v1840 = vpack.c.b16 %v1826, %v1825
    %v1841 = vpack.c.b16 %v1828, %v1827
    %v1842 = vpack.c.b16 %v1830, %v1829
    %v1843 = vpack.c.b16 %v1832, %v1831
    %v1844 = vpack.c.b16 %v1834, %v1833
    %v1845 = vpack.c.b16 %v1836, %v1835
    %v1846 = vpack.c.b16 %v1838, %v1837
    %1855 = vmatpush.bf16.msra.mxu0 %v1846
    %1856 = vmatpush.bf16.msra.mxu0 %v1845
    %1857 = vmatpush.bf16.msra.mxu0 %v1844
    %1858 = vmatpush.bf16.msra.mxu0 %v1843
    %1859 = vmatpush.bf16.msra.mxu0 %v1842
    %1860 = vmatpush.bf16.msra.mxu0 %v1841
    %1861 = vmatpush.bf16.msra.mxu0 %v1840
    %1862 = vmatpush.bf16.msra.mxu0 %v1839
    %1863 = vmatmul.bf16.gmra.mxu0 %v1786
    %v1864 = vpop.f32.mrf.mxu0
    %v1865 = vadd.f32 %v1805, %v1864
    %v1866 = vpop.f32.mrf.mxu0
    %v1867 = vadd.f32 %v1805, %v1866
    %1868 = vdwg.mxu0
    %1869 = vmax.xlane.f32.xlu0 %v1865
    %v1870 = vpop.xlane.xlu0 %1869
    %1871 = vmax.xlane.f32.xlu0 %v1867
    %v1872 = vpop.xlane.xlu0 %1871
    %v1873 = vsub.f32 %v1865, %v1870
    %v1874 = vsub.f32 %v1867, %v1872
    %v1875 = vmul.f32 %v1873, 1.442695
    %v1876 = vpow.pop %v1875
    %v1877 = vmul.f32 %v1874, 1.442695
    %v1878 = vpow.pop %v1877
    %1879 = vadd.xlane.f32.xlu0 %v1876
    %v1880 = vpop.xlane.xlu0 %1879
    %1881 = vadd.xlane.f32.xlu0 %v1878
    %v1882 = vpop.xlane.xlu0 %1881
    %v1883 = vrcp.pop %v1880
    %v1884 = vrcp.pop %v1882
    %v1885 = vmul.f32 %v1876, %v1883
    %v1886 = vmul.f32 %v1878, %v1884
    %v1887 = vpack.c.bf16 %v1885, %v1885
    %v1888 = vpack.c.bf16 %v1886, %v1886
    %1889 = vst [vmem:[#allocation10] sm:$0xf] %v1887
    %1890 = vst [vmem:[#allocation10 + $0x4] sm:$0xf] %v1888
    // Predicated region
    $region38: #{tpu_custom_call.1} parent=1 // pred_check
      _
    $region39: #{tpu_custom_call.1} parent=1 // pred_check_branch
      %1892 = sbr.rel (0) target = $region41
    $region40: #{tpu_custom_call.1} parent=1 // pred_region
      %1894 = vsyncadd [#allocation4], 0
      %s1895 = sshll.u32 [#allocation10], 4
      %s1896 = int_to_ptr.vmem [resolvable:$true] %s1895
      %s1897 = sshll.u32 %s5, 4
      %s1898 = int_to_ptr.hbm [resolvable:$true] %s1897
      %1903 = dma.vmem_to_hbm [thread:$0]  %s1896, 128, %s1898, [#allocation4], 64, 64, 4
    $region41: #{tpu_custom_call.1} parent=1 // pred_fallthru
      _
    // Predicated region
    $region42: #{tpu_custom_call.1} parent=1 // pred_check
      _
    $region43: #{tpu_custom_call.1} parent=1 // pred_check_branch
      %1905 = sbr.rel (0) target = $region45
    $region44: #{tpu_custom_call.1} parent=1 // pred_region
      %1907 = dma.done [#allocation4], 128
    $region45: #{tpu_custom_call.1} parent=1 // pred_fallthru
      _
    %1908 = vsyncpa [#allocation3], 1
    %1909 = vsyncpa [#allocation8], 1
    %1910 = vsyncpa [#allocation4], 1
    %1911 = vsyncpa [#allocation5], 1

</llo_original>
